<compile_context>
chip_gen: v7x
topology: tpu7x:2x2x1
jax: 0.10.0
libtpu: 0.0.40
codegen_flags: <defaults>
</compile_context>

<pallas_src>
import jax
import jax.numpy as jnp
from jax.experimental import pallas as pl
from jax.experimental.pallas import tpu as pltpu


# ----------------------------------------------------------------------------
# Helpers
# ----------------------------------------------------------------------------
def _round_up(x, m):
    return (x + m - 1) // m * m


def _pick_tile(M, tn_max):
    """Lane-tile: multiple of 128, <= tn_max, >= 2 grid blocks when possible."""
    half = -(-M // 2)  # ceil(M / 2)
    return max(128, min(tn_max, _round_up(half, 128)))


_CPARAMS = pltpu.CompilerParams(
    dimension_semantics=("parallel",),
    vmem_limit_bytes=32 * 1024 * 1024,
)

_K1_PAD = 64  # pad conv1's K=49 contraction to 64 with zeros (MXU-aligned)


# ----------------------------------------------------------------------------
# Kernels (channel-major: channels on sublanes, spatial positions on lanes)
# ----------------------------------------------------------------------------
def _conv1_relu_conv2_softmax_kernel(p_ref, w1_ref, b1_ref, w2_ref, b2_ref, o_ref):
    # p_ref : (K1, tn) bf16   im2col patches of conv1 (tap-major, zero-padded K)
    # w1_ref: (C,  K1) bf16   conv1 weight
    # b1_ref: (C,  1)  f32
    # w2_ref: (C,  C)  f32    conv2 (1x1) weight, VMEM-resident
    # b2_ref: (C,  1)  f32
    # o_ref : (C,  tn) bf16   softmax(conv2(relu(conv1(x))))  channel-major
    acc1 = jnp.dot(w1_ref[...], p_ref[...], preferred_element_type=jnp.float32)
    acc1 = acc1 + b1_ref[...]
    h = jnp.maximum(acc1, 0.0)                              # ReLU (f32)
    acc2 = jnp.dot(w2_ref[...], h, preferred_element_type=jnp.float32)
    acc2 = acc2 + b2_ref[...]
    m = jnp.max(acc2, axis=0, keepdims=True)                # softmax over channels
    e = jnp.exp(acc2 - m)
    s = jnp.sum(e, axis=0, keepdims=True)
    o_ref[...] = (e * pl.reciprocal(s, approx=True)).astype(o_ref.dtype)


def _conv_softmax_kernel(p_ref, w_ref, b_ref, o_ref):
    # p_ref: (K, tn) bf16   w_ref: (Cout, K) bf16   b_ref: (Cout, 1) f32
    acc = jnp.dot(w_ref[...], p_ref[...], preferred_element_type=jnp.float32)
    acc = acc + b_ref[...]
    m = jnp.max(acc, axis=0, keepdims=True)
    e = jnp.exp(acc - m)
    s = jnp.sum(e, axis=0, keepdims=True)
    o_ref[...] = (e * pl.reciprocal(s, approx=True)).astype(o_ref.dtype)


# ----------------------------------------------------------------------------
# pallas_call wrappers
# ----------------------------------------------------------------------------
def conv1_relu_conv2_softmax(p1t, w1t, b1, w2t, b2, *, tn_max=2048):
    """p1t: (K1, M) bf16, w1t: (C, K1) bf16, w2t: (C, C) f32 -> (C, M) bf16."""
    K1, M = p1t.shape
    C = w1t.shape[0]
    tn = _pick_tile(M, tn_max)
    Mp = _round_up(M, tn)
    if Mp != M:
        p1t = jnp.pad(p1t, ((0, 0), (0, Mp - M)))
    y = pl.pallas_call(
        _conv1_relu_conv2_softmax_kernel,
        out_shape=jax.ShapeDtypeStruct((C, Mp), jnp.bfloat16),
        grid_spec=pltpu.PrefetchScalarGridSpec(
            num_scalar_prefetch=0,
            grid=(Mp // tn,),
            in_specs=[
                pl.BlockSpec((K1, tn), lambda i: (0, i)),
                pl.BlockSpec((C, K1), lambda i: (0, 0)),
                pl.BlockSpec((C, 1), lambda i: (0, 0)),
                pl.BlockSpec((C, C), lambda i: (0, 0)),
                pl.BlockSpec((C, 1), lambda i: (0, 0)),
            ],
            out_specs=pl.BlockSpec((C, tn), lambda i: (0, i)),
        ),
        compiler_params=_CPARAMS,
    )(p1t, w1t, b1.reshape(C, 1), w2t, b2.reshape(C, 1))
    return y[:, :M]


def conv_softmax(p3t, w3t, b3, *, tn_max=2048):
    """p3t: (K, M) bf16, w3t: (Cout, K) bf16 -> (Cout, M) f32."""
    K, M = p3t.shape
    Cout = w3t.shape[0]
    tn = _pick_tile(M, tn_max)
    Mp = _round_up(M, tn)
    if Mp != M:
        p3t = jnp.pad(p3t, ((0, 0), (0, Mp - M)))
    y = pl.pallas_call(
        _conv_softmax_kernel,
        out_shape=jax.ShapeDtypeStruct((Cout, Mp), jnp.float32),
        grid_spec=pltpu.PrefetchScalarGridSpec(
            num_scalar_prefetch=0,
            grid=(Mp // tn,),
            in_specs=[
                pl.BlockSpec((K, tn), lambda i: (0, i)),
                pl.BlockSpec((Cout, K), lambda i: (0, 0)),
                pl.BlockSpec((Cout, 1), lambda i: (0, 0)),
            ],
            out_specs=pl.BlockSpec((Cout, tn), lambda i: (0, i)),
        ),
        compiler_params=_CPARAMS,
    )(p3t, w3t, b3.reshape(Cout, 1))
    return y[:, :M]


# ----------------------------------------------------------------------------
# Full model forward (NCHW in / NCHW out)
# ----------------------------------------------------------------------------
def model_forward(x_nchw, params):
    N, Cin, H, W = x_nchw.shape
    assert Cin == 1

    # ---- conv1 im2col, channel/tap-major: (49 -> 64 padded, N*H*W), bf16 ----
    xp = jnp.pad(x_nchw[:, 0], ((0, 0), (3, 3), (3, 3))).astype(jnp.bfloat16)
    slabs = [xp[:, dy:dy + H, dx:dx + W] for dy in range(7) for dx in range(7)]
    p1 = jnp.stack(slabs, axis=0).reshape(49, N * H * W)
    p1 = jnp.pad(p1, ((0, _K1_PAD - 49), (0, 0)))           # zero K padding
    w1t = params["w1"].reshape(64, 49).astype(jnp.bfloat16)  # (O, dy*7+dx)
    w1t = jnp.pad(w1t, ((0, 0), (0, _K1_PAD - 49)))
    w2t = params["w2"].reshape(64, 64)                       # f32, VMEM-resident

    # fused conv1 + ReLU + conv2(1x1) + channel softmax -> v4 (channel-major)
    y2 = conv1_relu_conv2_softmax(p1, w1t, params["b1"], w2t, params["b2"])
    v4 = y2.reshape(64, N, H, W)                             # bf16, "C,N,H,W"

    # ---- conv3 im2col (3x3, stride 2, pad 1), channel-major: (576, N*Ho*Wo) ----
    Ho, Wo = (H - 1) // 2 + 1, (W - 1) // 2 + 1
    v4p = jnp.pad(v4, ((0, 0), (0, 0), (1, 1), (1, 1)))
    slabs3 = [v4p[:, :, dy::2, dx::2][:, :, :Ho, :Wo]
              for dy in range(3) for dx in range(3)]
    p3 = jnp.stack(slabs3, axis=0).reshape(9 * 64, N * Ho * Wo)        # bf16
    w3t = jnp.transpose(params["w3"], (0, 2, 3, 1)).reshape(16, 9 * 64)
    w3t = w3t.astype(jnp.bfloat16)

    # fused conv3 + channel softmax
    y3 = conv_softmax(p3, w3t, params["b3"])                 # (16, N*Ho*Wo) f32
    return jnp.transpose(y3.reshape(16, N, Ho, Wo), (1, 0, 2, 3))      # NCHW


# ----------------------------------------------------------------------------
# Pure-JAX reference (lax.conv) for correctness check.
# ----------------------------------------------------------------------------
def reference_forward(x_nchw, params):
    def conv(x, w, b, stride, pad):
        y = jax.lax.conv_general_dilated(
            x, w, window_strides=(stride, stride),
            padding=[(pad, pad), (pad, pad)],
            dimension_numbers=("NCHW", "OIHW", "NCHW"))
        return y + b.reshape(1, -1, 1, 1)

    v1 = conv(x_nchw, params["w1"], params["b1"], 1, 3)
    v2 = jnp.maximum(v1, 0.0)
    v3 = conv(v2, params["w2"], params["b2"], 1, 0)
    v4 = jax.nn.softmax(v3, axis=1)   # PyTorch implicit softmax dim for 4-D is 1
    v5 = conv(v4, params["w3"], params["b3"], 2, 1)
    v6 = jax.nn.softmax(v5, axis=1)
    return v6


def init_params(key):
    def conv_init(k, cout, cin, kh, kw):
        fan_in = cin * kh * kw
        bound = 1.0 / jnp.sqrt(fan_in)
        kw_, kb_ = jax.random.split(k)
        w = jax.random.uniform(kw_, (cout, cin, kh, kw), jnp.float32, -bound, bound)
        b = jax.random.uniform(kb_, (cout,), jnp.float32, -bound, bound)
        return w, b

    k1, k2, k3 = jax.random.split(key, 3)
    w1, b1 = conv_init(k1, 64, 1, 7, 7)
    w2, b2 = conv_init(k2, 64, 64, 1, 1)
    w3, b3 = conv_init(k3, 16, 64, 3, 3)
    return {"w1": w1, "b1": b1, "w2": w2, "b2": b2, "w3": w3, "b3": b3}


if __name__ == "__main__":
    key = jax.random.PRNGKey(0)
    kx, kp = jax.random.split(key)
    # Small shape consistent with the module (original was 1x1x1024x1024).
    x = jax.random.normal(kx, (1, 1, 32, 32), jnp.float32)
    params = init_params(kp)

    out = jax.block_until_ready(jax.jit(model_forward)(x, params))
    ref = jax.block_until_ready(jax.jit(reference_forward)(x, params))

    assert out.shape == (1, 16, 16, 16), out.shape
    err = float(jnp.max(jnp.abs(out - ref)))
    # bf16 matmul operands + approx reciprocal -> loosen vs the f32 reference.
    assert err < 2e-3, f"max abs err {err}"
    print("KERNEL_OK")
</pallas_src>

<mosaic_0001>
module attributes {stable_mosaic.version = 11 : i64} {
  func.func @_conv1_relu_conv2_softmax_kernel(%arg0: i32, %arg1: memref<64x512xbf16, #tpu.memory_space<vmem>>, %arg2: memref<64x64xbf16, #tpu.memory_space<vmem>>, %arg3: memref<64x1xf32, #tpu.memory_space<vmem>>, %arg4: memref<64x64xf32, #tpu.memory_space<vmem>>, %arg5: memref<64x1xf32, #tpu.memory_space<vmem>>, %arg6: memref<64x512xbf16, #tpu.memory_space<vmem>>) attributes {dimension_semantics = [#tpu.dimension_semantics<parallel>], iteration_bounds = array<i64: 2>, scalar_prefetch = 0 : i64, scratch_operands = 0 : i64, tpu.core_type = #tpu.core_type<tc>, window_params = [{transform_indices = @transform_0, window_bounds = array<i64: 64, 512>}, {pipeline_mode = #tpu.pipeline_mode<synchronous>, transform_indices = @transform_1, window_bounds = array<i64: 64, 64>}, {pipeline_mode = #tpu.pipeline_mode<synchronous>, transform_indices = @transform_2, window_bounds = array<i64: 64, 1>}, {pipeline_mode = #tpu.pipeline_mode<synchronous>, transform_indices = @transform_3, window_bounds = array<i64: 64, 64>}, {pipeline_mode = #tpu.pipeline_mode<synchronous>, transform_indices = @transform_4, window_bounds = array<i64: 64, 1>}, {transform_indices = @transform_5, window_bounds = array<i64: 64, 512>}]} {
    %c0 = arith.constant 0 : index
    %c0_0 = arith.constant 0 : index
    %0 = vector.load %arg2[%c0, %c0_0] : memref<64x64xbf16, #tpu.memory_space<vmem>>, vector<64x64xbf16>
    %c0_1 = arith.constant 0 : index
    %c0_2 = arith.constant 0 : index
    %1 = vector.load %arg1[%c0_1, %c0_2] : memref<64x512xbf16, #tpu.memory_space<vmem>>, vector<64x512xbf16>
    %cst = arith.constant dense<0.000000e+00> : vector<64x512xf32>
    %2 = tpu.matmul %0, %1, %cst {dimension_numbers = #tpu.dot_dimension_numbers<[1], [0], [0], [1], [0, 0, 1, 1], [], []>} : vector<64x64xbf16>, vector<64x512xbf16>, vector<64x512xf32> -> vector<64x512xf32>
    %c0_3 = arith.constant 0 : index
    %c0_4 = arith.constant 0 : index
    %3 = vector.load %arg3[%c0_3, %c0_4] : memref<64x1xf32, #tpu.memory_space<vmem>>, vector<64x1xf32>
    %4 = vector.broadcast %3 : vector<64x1xf32> to vector<64x512xf32>
    %5 = arith.addf %2, %4 : vector<64x512xf32>
    %cst_5 = arith.constant 0.000000e+00 : f32
    %6 = vector.broadcast %cst_5 : f32 to vector<64x512xf32>
    %7 = arith.maximumf %5, %6 : vector<64x512xf32>
    %c0_6 = arith.constant 0 : index
    %c0_7 = arith.constant 0 : index
    %8 = vector.load %arg4[%c0_6, %c0_7] : memref<64x64xf32, #tpu.memory_space<vmem>>, vector<64x64xf32>
    %cst_8 = arith.constant dense<0.000000e+00> : vector<64x512xf32>
    %9 = tpu.matmul %8, %7, %cst_8 {dimension_numbers = #tpu.dot_dimension_numbers<[1], [0], [0], [1], [0, 0, 1, 1], [], []>} : vector<64x64xf32>, vector<64x512xf32>, vector<64x512xf32> -> vector<64x512xf32>
    %c0_9 = arith.constant 0 : index
    %c0_10 = arith.constant 0 : index
    %10 = vector.load %arg5[%c0_9, %c0_10] : memref<64x1xf32, #tpu.memory_space<vmem>>, vector<64x1xf32>
    %11 = vector.broadcast %10 : vector<64x1xf32> to vector<64x512xf32>
    %12 = arith.addf %9, %11 : vector<64x512xf32>
    %cst_11 = arith.constant dense<0xFF800000> : vector<512xf32>
    %13 = vector.multi_reduction <maximumf>, %12, %cst_11 [0] : vector<64x512xf32> to vector<512xf32>
    %14 = vector.shape_cast %13 : vector<512xf32> to vector<1x512xf32>
    %15 = vector.broadcast %14 : vector<1x512xf32> to vector<64x512xf32>
    %16 = arith.subf %12, %15 : vector<64x512xf32>
    %17 = math.exp %16 : vector<64x512xf32>
    %cst_12 = arith.constant dense<0.000000e+00> : vector<512xf32>
    %18 = vector.multi_reduction <add>, %17, %cst_12 [0] : vector<64x512xf32> to vector<512xf32>
    %19 = vector.shape_cast %18 : vector<512xf32> to vector<1x512xf32>
    %20 = tpu.reciprocal %19 {approx = true} : vector<1x512xf32> -> vector<1x512xf32>
    %21 = vector.broadcast %20 : vector<1x512xf32> to vector<64x512xf32>
    %22 = arith.mulf %17, %21 : vector<64x512xf32>
    %23 = arith.truncf %22 : vector<64x512xf32> to vector<64x512xbf16>
    %c0_13 = arith.constant 0 : index
    %c0_14 = arith.constant 0 : index
    %24 = vector.load %arg6[%c0_13, %c0_14] : memref<64x512xbf16, #tpu.memory_space<vmem>>, vector<64x512xbf16>
    tpu.vector_store %arg6[%c0_13, %c0_14], %23 {strides = array<i32>} : memref<64x512xbf16, #tpu.memory_space<vmem>>, vector<64x512xbf16>,
    return
  }
  func.func @transform_0(%arg0: i32) -> (i32, i32) {
    %c0_i32 = arith.constant 0 : i32
    %c0_i32_0 = arith.constant 0 : i32
    return %c0_i32, %arg0 : i32, i32
  }
  func.func @transform_1(%arg0: i32) -> (i32, i32) {
    %c0_i32 = arith.constant 0 : i32
    %c0_i32_0 = arith.constant 0 : i32
    %c0_i32_1 = arith.constant 0 : i32
    return %c0_i32, %c0_i32_0 : i32, i32
  }
  func.func @transform_2(%arg0: i32) -> (i32, i32) {
    %c0_i32 = arith.constant 0 : i32
    %c0_i32_0 = arith.constant 0 : i32
    %c0_i32_1 = arith.constant 0 : i32
    return %c0_i32, %c0_i32_0 : i32, i32
  }
  func.func @transform_3(%arg0: i32) -> (i32, i32) {
    %c0_i32 = arith.constant 0 : i32
    %c0_i32_0 = arith.constant 0 : i32
    %c0_i32_1 = arith.constant 0 : i32
    return %c0_i32, %c0_i32_0 : i32, i32
  }
  func.func @transform_4(%arg0: i32) -> (i32, i32) {
    %c0_i32 = arith.constant 0 : i32
    %c0_i32_0 = arith.constant 0 : i32
    %c0_i32_1 = arith.constant 0 : i32
    return %c0_i32, %c0_i32_0 : i32, i32
  }
  func.func @transform_5(%arg0: i32) -> (i32, i32) {
    %c0_i32 = arith.constant 0 : i32
    %c0_i32_0 = arith.constant 0 : i32
    return %c0_i32, %arg0 : i32, i32
  }
}

module attributes {stable_mosaic.version = 11 : i64} {
  func.func @_conv_softmax_kernel(%arg0: i32, %arg1: memref<576x128xbf16, #tpu.memory_space<vmem>>, %arg2: memref<16x576xbf16, #tpu.memory_space<vmem>>, %arg3: memref<16x1xf32, #tpu.memory_space<vmem>>, %arg4: memref<16x128xf32, #tpu.memory_space<vmem>>) attributes {dimension_semantics = [#tpu.dimension_semantics<parallel>], iteration_bounds = array<i64: 2>, scalar_prefetch = 0 : i64, scratch_operands = 0 : i64, tpu.core_type = #tpu.core_type<tc>, window_params = [{transform_indices = @transform_0, window_bounds = array<i64: 576, 128>}, {pipeline_mode = #tpu.pipeline_mode<synchronous>, transform_indices = @transform_1, window_bounds = array<i64: 16, 576>}, {pipeline_mode = #tpu.pipeline_mode<synchronous>, transform_indices = @transform_2, window_bounds = array<i64: 16, 1>}, {transform_indices = @transform_3, window_bounds = array<i64: 16, 128>}]} {
    %c0 = arith.constant 0 : index
    %c0_0 = arith.constant 0 : index
    %0 = vector.load %arg2[%c0, %c0_0] : memref<16x576xbf16, #tpu.memory_space<vmem>>, vector<16x576xbf16>
    %c0_1 = arith.constant 0 : index
    %c0_2 = arith.constant 0 : index
    %1 = vector.load %arg1[%c0_1, %c0_2] : memref<576x128xbf16, #tpu.memory_space<vmem>>, vector<576x128xbf16>
    %cst = arith.constant dense<0.000000e+00> : vector<16x128xf32>
    %2 = tpu.matmul %0, %1, %cst {dimension_numbers = #tpu.dot_dimension_numbers<[1], [0], [0], [1], [0, 0, 1, 1], [], []>} : vector<16x576xbf16>, vector<576x128xbf16>, vector<16x128xf32> -> vector<16x128xf32>
    %c0_3 = arith.constant 0 : index
    %c0_4 = arith.constant 0 : index
    %3 = vector.load %arg3[%c0_3, %c0_4] : memref<16x1xf32, #tpu.memory_space<vmem>>, vector<16x1xf32>
    %4 = vector.broadcast %3 : vector<16x1xf32> to vector<16x128xf32>
    %5 = arith.addf %2, %4 : vector<16x128xf32>
    %cst_5 = arith.constant dense<0xFF800000> : vector<128xf32>
    %6 = vector.multi_reduction <maximumf>, %5, %cst_5 [0] : vector<16x128xf32> to vector<128xf32>
    %7 = vector.shape_cast %6 : vector<128xf32> to vector<1x128xf32>
    %8 = vector.broadcast %7 : vector<1x128xf32> to vector<16x128xf32>
    %9 = arith.subf %5, %8 : vector<16x128xf32>
    %10 = math.exp %9 : vector<16x128xf32>
    %cst_6 = arith.constant dense<0.000000e+00> : vector<128xf32>
    %11 = vector.multi_reduction <add>, %10, %cst_6 [0] : vector<16x128xf32> to vector<128xf32>
    %12 = vector.shape_cast %11 : vector<128xf32> to vector<1x128xf32>
    %13 = tpu.reciprocal %12 {approx = true} : vector<1x128xf32> -> vector<1x128xf32>
    %14 = vector.broadcast %13 : vector<1x128xf32> to vector<16x128xf32>
    %15 = arith.mulf %10, %14 : vector<16x128xf32>
    %c0_7 = arith.constant 0 : index
    %c0_8 = arith.constant 0 : index
    %16 = vector.load %arg4[%c0_7, %c0_8] : memref<16x128xf32, #tpu.memory_space<vmem>>, vector<16x128xf32>
    tpu.vector_store %arg4[%c0_7, %c0_8], %15 {strides = array<i32>} : memref<16x128xf32, #tpu.memory_space<vmem>>, vector<16x128xf32>,
    return
  }
  func.func @transform_0(%arg0: i32) -> (i32, i32) {
    %c0_i32 = arith.constant 0 : i32
    %c0_i32_0 = arith.constant 0 : i32
    return %c0_i32, %arg0 : i32, i32
  }
  func.func @transform_1(%arg0: i32) -> (i32, i32) {
    %c0_i32 = arith.constant 0 : i32
    %c0_i32_0 = arith.constant 0 : i32
    %c0_i32_1 = arith.constant 0 : i32
    return %c0_i32, %c0_i32_0 : i32, i32
  }
  func.func @transform_2(%arg0: i32) -> (i32, i32) {
    %c0_i32 = arith.constant 0 : i32
    %c0_i32_0 = arith.constant 0 : i32
    %c0_i32_1 = arith.constant 0 : i32
    return %c0_i32, %c0_i32_0 : i32, i32
  }
  func.func @transform_3(%arg0: i32) -> (i32, i32) {
    %c0_i32 = arith.constant 0 : i32
    %c0_i32_0 = arith.constant 0 : i32
    return %c0_i32, %arg0 : i32, i32
  }
}

</mosaic_0001>

<llo_original>
// kernel: model_forward.2
$region0: #{model_forward.2}
  #allocation0 [shape = 'u32[]', space=smem, size = 0x4, offset = 0x4, fixed_abs, tag = 'smem constant byte address 0x4 - core index']
  #allocation1 [shape = 'u32[144,128]{1,0:T(1,128)}', space=vmem, size = 0x12000, scoped, tag = 'internal scratch']
  %s0 = inlined_call_operand.vmem [shape: bf16[64,1024], index: 0, kind: input, shape index: {}]
  %s1 = inlined_call_operand.vmem [shape: bf16[64,64], index: 1, kind: input, shape index: {}]
  %s2 = inlined_call_operand.vmem [shape: f32[64,1], index: 2, kind: input, shape index: {}]
  %s3 = inlined_call_operand.vmem [shape: f32[64,64], index: 3, kind: input, shape index: {}]
  %s4 = inlined_call_operand.vmem [shape: f32[64,1], index: 4, kind: input, shape index: {}]
  %s5 = inlined_call_operand.vmem [shape: bf16[64,1024], index: 5, kind: output, shape index: {}]
  %s6 = sld [smem:[#allocation0]]
  $region95: #{model_forward.2} parent=0
    _
  %s8 = ssub.s32 1, %s6
  %s9 = scalar_select 0, %s8, %s6
  $region1: #{model_forward.2} parent=0
    #allocation2 [shape = 'u8[131072]{0}', space=vmem, size = 0x20000, scoped, tag = 'input window, operand 0']
    #allocation3 [shape = 'u8[131072]{0}', space=vmem, size = 0x20000, scoped, tag = 'output window, operand 0']
    loop: start=0, step=1, limit=4
    $region2: #{model_forward.2} parent=1 // loop_pre_header
      _
    $region3: #{model_forward.2} parent=1 // loop_header
      %s11 = sphi 0, %s15
      %p12 = scmp.ge.s32.totalorder %s11, 4
      %s21 = sphi 0, %s23
      %s24 = sphi 0, %s21
      %s25 = sphi 0, %s24
      %s41 = sphi 0, %s25
      %s45 = sphi 0, %s45
      %s47 = sphi 0, %s45
      %s48 = sphi 0, %s47
      %s62 = sphi 0, %s48
      %s66 = sphi 0, %s66
      %s68 = sphi 0, %s66
      %s69 = sphi 0, %s68
      %s83 = sphi 0, %s69
      %s87 = sphi 0, %s87
      %s89 = sphi 0, %s87
      %s90 = sphi 0, %s89
      %s104 = sphi 0, %s90
      %s108 = sphi 0, %s108
      %s110 = sphi 0, %s108
      %s111 = sphi 0, %s110
      %s125 = sphi 0, %s111
      %s131 = sphi 0, %s133
      %s134 = sphi 0, %s131
      %s135 = sphi 0, %s134
      %s151 = sphi 0, %s135
    $region4: #{model_forward.2} parent=1 // loop_header_branch
      %14 = sbr.rel (%p12) target = $region8
    $region5: #{model_forward.2} parent=1 // loop_body
      %s16 = ssub.s32 %s11, 1
      %s17 = ssub.s32 %s11, 2
      %s18 = sadd.s32 %s11, 1
      %s19 = ssub.s32 %s11, %s18
      %p20 = scmp.eq.s32.totalorder %s19, 0
      %s22 = sadd.s32 %s21, 1
      %s23 = scalar_select %p20, %s21, %s22
      %p26 = pneg %p20
      %p27 = scmp.eq.s32.totalorder %s11, 1
      %p28 = por %p26, %p27
      %p29 = scmp.ne.s32.totalorder %s21, %s24
      %p30 = scmp.eq.s32.totalorder %s11, 0
      %p31 = por %p29, %p30
      %p32 = scmp.ne.s32.totalorder %s21, %s24
      %p33 = scmp.eq.s32.totalorder %s16, 1
      %p34 = por %p32, %p33
      %p35 = scmp.ne.s32.totalorder %s24, %s25
      %p36 = scmp.eq.s32.totalorder %s16, 0
      %p37 = por %p35, %p36
      %p38 = scmp.ne.s32.totalorder %s24, %s25
      %p39 = scmp.eq.s32.totalorder %s17, 1
      %p40 = por %p38, %p39
      %p42 = scmp.ne.s32.totalorder %s25, %s41
      %p43 = scmp.eq.s32.totalorder %s17, 0
      %p44 = por %p42, %p43
      %s46 = sadd.s32 %s45, 1
      %p49 = scmp.eq.s32.totalorder %s11, 1
      %p50 = scmp.ne.s32.totalorder %s45, %s47
      %p51 = scmp.eq.s32.totalorder %s11, 0
      %p52 = por %p50, %p51
      %p53 = scmp.ne.s32.totalorder %s45, %s47
      %p54 = scmp.eq.s32.totalorder %s16, 1
      %p55 = por %p53, %p54
      %p56 = scmp.ne.s32.totalorder %s47, %s48
      %p57 = scmp.eq.s32.totalorder %s16, 0
      %p58 = por %p56, %p57
      %p59 = scmp.ne.s32.totalorder %s47, %s48
      %p60 = scmp.eq.s32.totalorder %s17, 1
      %p61 = por %p59, %p60
      %p63 = scmp.ne.s32.totalorder %s48, %s62
      %p64 = scmp.eq.s32.totalorder %s17, 0
      %p65 = por %p63, %p64
      %s67 = sadd.s32 %s66, 1
      %p70 = scmp.eq.s32.totalorder %s11, 1
      %p71 = scmp.ne.s32.totalorder %s66, %s68
      %p72 = scmp.eq.s32.totalorder %s11, 0
      %p73 = por %p71, %p72
      %p74 = scmp.ne.s32.totalorder %s66, %s68
      %p75 = scmp.eq.s32.totalorder %s16, 1
      %p76 = por %p74, %p75
      %p77 = scmp.ne.s32.totalorder %s68, %s69
      %p78 = scmp.eq.s32.totalorder %s16, 0
      %p79 = por %p77, %p78
      %p80 = scmp.ne.s32.totalorder %s68, %s69
      %p81 = scmp.eq.s32.totalorder %s17, 1
      %p82 = por %p80, %p81
      %p84 = scmp.ne.s32.totalorder %s69, %s83
      %p85 = scmp.eq.s32.totalorder %s17, 0
      %p86 = por %p84, %p85
      %s88 = sadd.s32 %s87, 1
      %p91 = scmp.eq.s32.totalorder %s11, 1
      %p92 = scmp.ne.s32.totalorder %s87, %s89
      %p93 = scmp.eq.s32.totalorder %s11, 0
      %p94 = por %p92, %p93
      %p95 = scmp.ne.s32.totalorder %s87, %s89
      %p96 = scmp.eq.s32.totalorder %s16, 1
      %p97 = por %p95, %p96
      %p98 = scmp.ne.s32.totalorder %s89, %s90
      %p99 = scmp.eq.s32.totalorder %s16, 0
      %p100 = por %p98, %p99
      %p101 = scmp.ne.s32.totalorder %s89, %s90
      %p102 = scmp.eq.s32.totalorder %s17, 1
      %p103 = por %p101, %p102
      %p105 = scmp.ne.s32.totalorder %s90, %s104
      %p106 = scmp.eq.s32.totalorder %s17, 0
      %p107 = por %p105, %p106
      %s109 = sadd.s32 %s108, 1
      %p112 = scmp.eq.s32.totalorder %s11, 1
      %p113 = scmp.ne.s32.totalorder %s108, %s110
      %p114 = scmp.eq.s32.totalorder %s11, 0
      %p115 = por %p113, %p114
      %p116 = scmp.ne.s32.totalorder %s108, %s110
      %p117 = scmp.eq.s32.totalorder %s16, 1
      %p118 = por %p116, %p117
      %p119 = scmp.ne.s32.totalorder %s110, %s111
      %p120 = scmp.eq.s32.totalorder %s16, 0
      %p121 = por %p119, %p120
      %p122 = scmp.ne.s32.totalorder %s110, %s111
      %p123 = scmp.eq.s32.totalorder %s17, 1
      %p124 = por %p122, %p123
      %p126 = scmp.ne.s32.totalorder %s111, %s125
      %p127 = scmp.eq.s32.totalorder %s17, 0
      %p128 = por %p126, %p127
      %s129 = ssub.s32 %s11, %s18
      %p130 = scmp.eq.s32.totalorder %s129, 0
      %s132 = sadd.s32 %s131, 1
      %s133 = scalar_select %p130, %s131, %s132
      %p136 = pneg %p130
      %p137 = scmp.eq.s32.totalorder %s11, 1
      %p138 = por %p136, %p137
      %p139 = scmp.ne.s32.totalorder %s131, %s134
      %p140 = scmp.eq.s32.totalorder %s11, 0
      %p141 = por %p139, %p140
      %p142 = scmp.ne.s32.totalorder %s131, %s134
      %p143 = scmp.eq.s32.totalorder %s16, 1
      %p144 = por %p142, %p143
      %p145 = scmp.ne.s32.totalorder %s134, %s135
      %p146 = scmp.eq.s32.totalorder %s16, 0
      %p147 = por %p145, %p146
      %p148 = scmp.ne.s32.totalorder %s134, %s135
      %p149 = scmp.eq.s32.totalorder %s17, 1
      %p150 = por %p148, %p149
      %p152 = scmp.ne.s32.totalorder %s135, %s151
      %p153 = scmp.eq.s32.totalorder %s17, 0
      %p154 = por %p152, %p153
      %p155 = scmp.le.s32.totalorder 1, %s11
      %p156 = scmp.lt.s32.totalorder %s11, 3
      %p157 = pnand %p155, %p156
      %p158 = pneg %p157
      // Predicated region
      $region9: #{model_forward.2} parent=5 // pred_check
        _
      $region10: #{model_forward.2} parent=5 // pred_check_branch
        %160 = sbr.rel (%p157) target = $region12
      $region11: #{model_forward.2} parent=5 // pred_region
        %s161 = ssub.s32 %s11, 1
        // Predicated region
        $region13: #{model_forward.2} parent=11 // pred_check
          %p162 = pneg %p58
        $region14: #{model_forward.2} parent=11 // pred_check_branch
          %164 = sbr.rel (%p162) target = $region16
        $region15: #{model_forward.2} parent=11 // pred_region
          _
        $region16: #{model_forward.2} parent=11 // pred_fallthru
          _
        // Predicated region
        $region17: #{model_forward.2} parent=11 // pred_check
          %p165 = pneg %p79
        $region18: #{model_forward.2} parent=11 // pred_check_branch
          %167 = sbr.rel (%p165) target = $region20
        $region19: #{model_forward.2} parent=11 // pred_region
          _
        $region20: #{model_forward.2} parent=11 // pred_fallthru
          _
        // Predicated region
        $region21: #{model_forward.2} parent=11 // pred_check
          %p168 = pneg %p100
        $region22: #{model_forward.2} parent=11 // pred_check_branch
          %170 = sbr.rel (%p168) target = $region24
        $region23: #{model_forward.2} parent=11 // pred_region
          _
        $region24: #{model_forward.2} parent=11 // pred_fallthru
          _
        // Predicated region
        $region25: #{model_forward.2} parent=11 // pred_check
          %p171 = pneg %p121
        $region26: #{model_forward.2} parent=11 // pred_check_branch
          %173 = sbr.rel (%p171) target = $region28
        $region27: #{model_forward.2} parent=11 // pred_region
          _
        $region28: #{model_forward.2} parent=11 // pred_fallthru
          _
      $region12: #{model_forward.2} parent=5 // pred_fallthru
        _
      %p174 = scmp.lt.s32.totalorder %s11, 2
      // Predicated region
      $region29: #{model_forward.2} parent=5 // pred_check
        %p175 = pneg %p174
      $region30: #{model_forward.2} parent=5 // pred_check_branch
        %177 = sbr.rel (%p175) target = $region32
      $region31: #{model_forward.2} parent=5 // pred_region
        // Predicated region
        $region33: #{model_forward.2} parent=31 // pred_check
          %p178 = pneg %p31
        $region34: #{model_forward.2} parent=31 // pred_check_branch
          %180 = sbr.rel (%p178) target = $region36
        $region35: #{model_forward.2} parent=31 // pred_region
          %s181 = sand.u32 %s21, 1
          %s182 = sand.u32 %s21, 1
          %s183 = smul.addr %s182, 128
          %s184 = scalar_lea.vmem [#allocation2], %s183
          %s185 = smul.u32 4, %s11
          %s186 = smul.addr %s185, 4
          %s187 = scalar_lea.vmem %s0, %s186
          // Predicated region
          $region37: #{model_forward.2} parent=35 // pred_check
            _
          $region38: #{model_forward.2} parent=35 // pred_check_branch
            %189 = sbr.rel (0) target = $region40
          $region39: #{model_forward.2} parent=35 // pred_region
            // Predicated region
            $region41: #{model_forward.2} parent=39 // pred_check
              _
            $region42: #{model_forward.2} parent=39 // pred_check_branch
              %191 = sbr.rel (0) target = $region44
            $region43: #{model_forward.2} parent=39 // pred_region
              loop: start=0, step=1, limit=1
              $region45: #{model_forward.2} parent=43 // loop_pre_header
                _
              $region46: #{model_forward.2} parent=43 // loop_header
                %s193 = sphi 0, %s197
                %p194 = scmp.ge.s32.totalorder %s193, 1
                %s198 = sphi %s187, %s187
                %s199 = sphi %s184, %s184
              $region47: #{model_forward.2} parent=43 // loop_header_branch
                %196 = sbr.rel (%p194) target = $region51
              $region48: #{model_forward.2} parent=43 // loop_body
                %v200 = vld [vmem:[%s198] sm:$0xff]
                %201 = vst [vmem:[%s199] sm:$0xff] %v200
                %v202 = vld [vmem:[%s198 + $0x8] sm:$0xff]
                %203 = vst [vmem:[%s199 + $0x8] sm:$0xff] %v202
                %v204 = vld [vmem:[%s198 + $0x20] sm:$0xff]
                %205 = vst [vmem:[%s199 + $0x10] sm:$0xff] %v204
                %v206 = vld [vmem:[%s198 + $0x28] sm:$0xff]
                %207 = vst [vmem:[%s199 + $0x18] sm:$0xff] %v206
                %v208 = vld [vmem:[%s198 + $0x40] sm:$0xff]
                %209 = vst [vmem:[%s199 + $0x20] sm:$0xff] %v208
                %v210 = vld [vmem:[%s198 + $0x48] sm:$0xff]
                %211 = vst [vmem:[%s199 + $0x28] sm:$0xff] %v210
                %v212 = vld [vmem:[%s198 + $0x60] sm:$0xff]
                %213 = vst [vmem:[%s199 + $0x30] sm:$0xff] %v212
                %v214 = vld [vmem:[%s198 + $0x68] sm:$0xff]
                %215 = vst [vmem:[%s199 + $0x38] sm:$0xff] %v214
                %v216 = vld [vmem:[%s198 + $0x80] sm:$0xff]
                %217 = vst [vmem:[%s199 + $0x40] sm:$0xff] %v216
                %v218 = vld [vmem:[%s198 + $0x88] sm:$0xff]
                %219 = vst [vmem:[%s199 + $0x48] sm:$0xff] %v218
                %v220 = vld [vmem:[%s198 + $0xa0] sm:$0xff]
                %221 = vst [vmem:[%s199 + $0x50] sm:$0xff] %v220
                %v222 = vld [vmem:[%s198 + $0xa8] sm:$0xff]
                %223 = vst [vmem:[%s199 + $0x58] sm:$0xff] %v222
                %v224 = vld [vmem:[%s198 + $0xc0] sm:$0xff]
                %225 = vst [vmem:[%s199 + $0x60] sm:$0xff] %v224
                %v226 = vld [vmem:[%s198 + $0xc8] sm:$0xff]
                %227 = vst [vmem:[%s199 + $0x68] sm:$0xff] %v226
                %v228 = vld [vmem:[%s198 + $0xe0] sm:$0xff]
                %229 = vst [vmem:[%s199 + $0x70] sm:$0xff] %v228
                %v230 = vld [vmem:[%s198 + $0xe8] sm:$0xff]
                %231 = vst [vmem:[%s199 + $0x78] sm:$0xff] %v230
              $region49: #{model_forward.2} parent=43 // loop_footer
                %s197 = sadd.s32 1, %s193
              $region50: #{model_forward.2} parent=43 // loop_footer_branch
                %192 = sbr.rel target = $region46
              $region51: #{model_forward.2} parent=43 // loop_exit
                _
            $region44: #{model_forward.2} parent=39 // pred_fallthru
              _
            // Predicated region
            $region52: #{model_forward.2} parent=39 // pred_check
              _
            $region53: #{model_forward.2} parent=39 // pred_check_branch
              %233 = sbr.rel target = $region55
            $region54: #{model_forward.2} parent=39 // pred_region
              _
            $region55: #{model_forward.2} parent=39 // pred_fallthru
              _
          $region40: #{model_forward.2} parent=35 // pred_fallthru
            _
          %234 = vnop
        $region36: #{model_forward.2} parent=31 // pred_fallthru
          _
      $region32: #{model_forward.2} parent=5 // pred_fallthru
        _
      %p235 = scmp.le.s32.totalorder 1, %s11
      %p236 = scmp.lt.s32.totalorder %s11, 3
      %p237 = pnand %p235, %p236
      %p238 = pneg %p237
      // Predicated region
      $region56: #{model_forward.2} parent=5 // pred_check
        _
      $region57: #{model_forward.2} parent=5 // pred_check_branch
        %240 = sbr.rel (%p237) target = $region59
      $region58: #{model_forward.2} parent=5 // pred_region
        %s241 = ssub.s32 %s11, 1
        %s242 = sand.u32 %s24, 1
        %s243 = sand.u32 %s24, 1
        %s244 = smul.addr %s243, 128
        %s245 = scalar_lea.vmem [#allocation2], %s244
        // Predicated region
        $region60: #{model_forward.2} parent=58 // pred_check
          %p246 = pneg %p37
        $region61: #{model_forward.2} parent=58 // pred_check_branch
          %248 = sbr.rel (%p246) target = $region63
        $region62: #{model_forward.2} parent=58 // pred_region
          _
        $region63: #{model_forward.2} parent=58 // pred_fallthru
          _
        %s249 = sand.u32 %s24, 1
        %s250 = sand.u32 %s24, 1
        %s251 = smul.addr %s250, 128
        %s252 = scalar_lea.vmem [#allocation2], %s251
        %p253 = pneg %p37
        %p254 = pneg %p34
        %p255 = pneg %p58
        %p256 = pneg %p55
        %p257 = pneg %p79
        %p258 = pneg %p76
        %p259 = pneg %p100
        %p260 = pneg %p97
        %p261 = pneg %p121
        %p262 = pneg %p118
        %p263 = pneg %p147
        %p264 = pneg %p144
        %s265 = sand.u32 %s134, 1
        %s266 = sand.u32 %s134, 1
        %s267 = smul.addr %s266, 128
        %s268 = scalar_lea.vmem [#allocation3], %s267
        %s269 = smul.u32 4, %s16
        %s270 = smul.u32 4, %s16
        %v272 = vld [vmem:[%s1] sm:$0xf]
        %v273 = vld [vmem:[%s1 + $0x4] sm:$0xf]
        %v274 = vld [vmem:[%s1 + $0x8] sm:$0xf]
        %v275 = vld [vmem:[%s1 + $0xc] sm:$0xf]
        %v276 = vld [vmem:[%s1 + $0x10] sm:$0xf]
        %v277 = vld [vmem:[%s1 + $0x14] sm:$0xf]
        %v278 = vld [vmem:[%s1 + $0x18] sm:$0xf]
        %v279 = vld [vmem:[%s1 + $0x1c] sm:$0xf]
        %v280 = vld [vmem:[%s245] sm:$0xff]
        %v281 = vld [vmem:[%s245 + $0x8] sm:$0xff]
        %v282 = vld [vmem:[%s245 + $0x10] sm:$0xff]
        %v283 = vld [vmem:[%s245 + $0x18] sm:$0xff]
        %v284 = vld [vmem:[%s245 + $0x20] sm:$0xff]
        %v285 = vld [vmem:[%s245 + $0x28] sm:$0xff]
        %v286 = vld [vmem:[%s245 + $0x30] sm:$0xff]
        %v287 = vld [vmem:[%s245 + $0x38] sm:$0xff]
        %v288 = vld [vmem:[%s245 + $0x40] sm:$0xff]
        %v289 = vld [vmem:[%s245 + $0x48] sm:$0xff]
        %v290 = vld [vmem:[%s245 + $0x50] sm:$0xff]
        %v291 = vld [vmem:[%s245 + $0x58] sm:$0xff]
        %v292 = vld [vmem:[%s245 + $0x60] sm:$0xff]
        %v293 = vld [vmem:[%s245 + $0x68] sm:$0xff]
        %v294 = vld [vmem:[%s245 + $0x70] sm:$0xff]
        %v295 = vld [vmem:[%s245 + $0x78] sm:$0xff]
        %v296 = vld [vmem:[%s2] sm:$0xff]
        %v297 = vld [vmem:[%s2 + $0x8] sm:$0xff]
        %v298 = vld [vmem:[%s2 + $0x10] sm:$0xff]
        %v299 = vld [vmem:[%s2 + $0x18] sm:$0xff]
        %v300 = vld [vmem:[%s2 + $0x20] sm:$0xff]
        %v301 = vld [vmem:[%s2 + $0x28] sm:$0xff]
        %v302 = vld [vmem:[%s2 + $0x30] sm:$0xff]
        %v303 = vld [vmem:[%s2 + $0x38] sm:$0xff]
        %305 = vset.pattern.permute.xlu0 0
        %306 = vperm.xlu0 %305, %v296
        %v307 = vpop.permute.xlu0 %306
        %310 = vset.pattern.permute.xlu0 0
        %311 = vperm.xlu0 %310, %v297
        %v312 = vpop.permute.xlu0 %311
        %315 = vset.pattern.permute.xlu0 0
        %316 = vperm.xlu0 %315, %v298
        %v317 = vpop.permute.xlu0 %316
        %320 = vset.pattern.permute.xlu0 0
        %321 = vperm.xlu0 %320, %v299
        %v322 = vpop.permute.xlu0 %321
        %325 = vset.pattern.permute.xlu0 0
        %326 = vperm.xlu0 %325, %v300
        %v327 = vpop.permute.xlu0 %326
        %330 = vset.pattern.permute.xlu0 0
        %331 = vperm.xlu0 %330, %v301
        %v332 = vpop.permute.xlu0 %331
        %335 = vset.pattern.permute.xlu0 0
        %336 = vperm.xlu0 %335, %v302
        %v337 = vpop.permute.xlu0 %336
        %340 = vset.pattern.permute.xlu0 0
        %341 = vperm.xlu0 %340, %v303
        %v342 = vpop.permute.xlu0 %341
        %v352 = vunpack.c.l.b16 %v272
        %v353 = vunpack.c.l.b16 %v273
        %v354 = vunpack.c.l.b16 %v274
        %v355 = vunpack.c.l.b16 %v275
        %v356 = vunpack.c.l.b16 %v276
        %v357 = vunpack.c.l.b16 %v277
        %v358 = vunpack.c.l.b16 %v278
        %v359 = vunpack.c.l.b16 %v279
        %v360 = vpack.c.b16 %v353, %v352
        %v361 = vpack.c.b16 %v355, %v354
        %v362 = vpack.c.b16 %v357, %v356
        %v363 = vpack.c.b16 %v359, %v358
        %v380 = vunpack.c.l.b16 %v280
        %v381 = vunpack.c.h.b16 %v280
        %v382 = vunpack.c.l.b16 %v281
        %v383 = vunpack.c.h.b16 %v281
        %v384 = vunpack.c.l.b16 %v282
        %v385 = vunpack.c.h.b16 %v282
        %v386 = vunpack.c.l.b16 %v283
        %v387 = vunpack.c.h.b16 %v283
        %v388 = vunpack.c.l.b16 %v284
        %v389 = vunpack.c.h.b16 %v284
        %v390 = vunpack.c.l.b16 %v285
        %v391 = vunpack.c.h.b16 %v285
        %v392 = vunpack.c.l.b16 %v286
        %v393 = vunpack.c.h.b16 %v286
        %v394 = vunpack.c.l.b16 %v287
        %v395 = vunpack.c.h.b16 %v287
        %v396 = vunpack.c.l.b16 %v288
        %v397 = vunpack.c.h.b16 %v288
        %v398 = vunpack.c.l.b16 %v289
        %v399 = vunpack.c.h.b16 %v289
        %v400 = vunpack.c.l.b16 %v290
        %v401 = vunpack.c.h.b16 %v290
        %v402 = vunpack.c.l.b16 %v291
        %v403 = vunpack.c.h.b16 %v291
        %v404 = vunpack.c.l.b16 %v292
        %v405 = vunpack.c.h.b16 %v292
        %v406 = vunpack.c.l.b16 %v293
        %v407 = vunpack.c.h.b16 %v293
        %v408 = vunpack.c.l.b16 %v294
        %v409 = vunpack.c.h.b16 %v294
        %v410 = vunpack.c.l.b16 %v295
        %v411 = vunpack.c.h.b16 %v295
        %v412 = vpack.c.b16 %v384, %v380
        %v413 = vpack.c.b16 %v385, %v381
        %v414 = vpack.c.b16 %v386, %v382
        %v415 = vpack.c.b16 %v387, %v383
        %v416 = vpack.c.b16 %v392, %v388
        %v417 = vpack.c.b16 %v393, %v389
        %v418 = vpack.c.b16 %v394, %v390
        %v419 = vpack.c.b16 %v395, %v391
        %v420 = vpack.c.b16 %v400, %v396
        %v421 = vpack.c.b16 %v401, %v397
        %v422 = vpack.c.b16 %v402, %v398
        %v423 = vpack.c.b16 %v403, %v399
        %v424 = vpack.c.b16 %v408, %v404
        %v425 = vpack.c.b16 %v409, %v405
        %v426 = vpack.c.b16 %v410, %v406
        %v427 = vpack.c.b16 %v411, %v407
        %vm444 = vcmask 523264
        %v446 = vsel %vm444, %v360, 0
        %v449 = vsel %vm444, %v361, 0
        %v452 = vsel %vm444, %v362, 0
        %v455 = vsel %vm444, %v363, 0
        %457 = vmatprep.subr.bf16.mxu0 %v413
        %458 = vmatpush1.bf16.msra.mxu0 %v412
        %459 = vmatprep.subr.bf16.mxu0 %v417
        %460 = vmatpush1.bf16.msra.mxu0 %v416
        %461 = vmatprep.subr.bf16.mxu0 %v421
        %462 = vmatpush1.bf16.msra.mxu0 %v420
        %463 = vmatprep.subr.bf16.mxu0 %v425
        %464 = vmatpush1.bf16.msra.mxu0 %v424
        %465 = vmatprep.subr.bf16.mxu0 0
        %466 = vmatpush1.bf16.msra.mxu0 0
        %467 = vmatprep.subr.bf16.mxu0 0
        %468 = vmatpush1.bf16.msra.mxu0 0
        %469 = vmatprep.subr.bf16.mxu0 0
        %470 = vmatpush1.bf16.msra.mxu0 0
        %471 = vmatprep.subr.bf16.mxu0 0
        %472 = vmatpush1.bf16.msra.mxu0 0
        %473 = vmatprep.subr.bf16.mxu0 0
        %474 = vmatpush1.bf16.msra.mxu0 0
        %475 = vmatprep.subr.bf16.mxu0 0
        %476 = vmatpush1.bf16.msra.mxu0 0
        %477 = vmatprep.subr.bf16.mxu0 0
        %478 = vmatpush1.bf16.msra.mxu0 0
        %479 = vmatprep.subr.bf16.mxu0 0
        %480 = vmatpush1.bf16.msra.mxu0 0
        %481 = vmatprep.subr.bf16.mxu0 0
        %482 = vmatpush1.bf16.msra.mxu0 0
        %483 = vmatprep.subr.bf16.mxu0 0
        %484 = vmatpush1.bf16.msra.mxu0 0
        %485 = vmatprep.subr.bf16.mxu0 0
        %486 = vmatpush1.bf16.msra.mxu0 0
        %487 = vmatprep.subr.bf16.mxu0 0
        %488 = vmatpush1.bf16.msra.mxu0 0
        %489 = vmatprep.mubr.bf16.mxu0 0
        %490 = vmatmul.mubr.bf16.gmra.mrb[0].mxu0 %v446
        %v491 = vpop.f32.mrb[0].mxu0
        %v492 = vadd.f32 %v307, %v491
        %v493 = vpop.f32.mrb[0].mxu0
        %v494 = vadd.f32 %v307, %v493
        %v495 = vpop.f32.mrb[0].mxu0
        %v496 = vadd.f32 %v312, %v495
        %v497 = vpop.f32.mrb[0].mxu0
        %v498 = vadd.f32 %v312, %v497
        %499 = vmatprep.mubr.bf16.mxu0 0
        %500 = vmatmul.mubr.bf16.gmra.mrb[0].mxu0 %v449
        %v501 = vpop.f32.mrb[0].mxu0
        %v502 = vadd.f32 %v317, %v501
        %v503 = vpop.f32.mrb[0].mxu0
        %v504 = vadd.f32 %v317, %v503
        %v505 = vpop.f32.mrb[0].mxu0
        %v506 = vadd.f32 %v322, %v505
        %v507 = vpop.f32.mrb[0].mxu0
        %v508 = vadd.f32 %v322, %v507
        %509 = vmatprep.mubr.bf16.mxu0 0
        %510 = vmatmul.mubr.bf16.gmra.mrb[0].mxu0 %v452
        %v511 = vpop.f32.mrb[0].mxu0
        %v512 = vadd.f32 %v327, %v511
        %v513 = vpop.f32.mrb[0].mxu0
        %v514 = vadd.f32 %v327, %v513
        %v515 = vpop.f32.mrb[0].mxu0
        %v516 = vadd.f32 %v332, %v515
        %v517 = vpop.f32.mrb[0].mxu0
        %v518 = vadd.f32 %v332, %v517
        %519 = vmatprep.mubr.bf16.mxu0 0
        %520 = vmatmul.mubr.bf16.gmra.mrb[0].mxu0 %v455
        %v521 = vpop.f32.mrb[0].mxu0
        %v522 = vadd.f32 %v337, %v521
        %v523 = vpop.f32.mrb[0].mxu0
        %v524 = vadd.f32 %v337, %v523
        %v525 = vpop.f32.mrb[0].mxu0
        %v526 = vadd.f32 %v342, %v525
        %v527 = vpop.f32.mrb[0].mxu0
        %v528 = vadd.f32 %v342, %v527
        %529 = vdwg.mxu0
        %530 = vmatprep.subr.bf16.mxu0 %v415
        %531 = vmatpush1.bf16.msra.mxu0 %v414
        %532 = vmatprep.subr.bf16.mxu0 %v419
        %533 = vmatpush1.bf16.msra.mxu0 %v418
        %534 = vmatprep.subr.bf16.mxu0 %v423
        %535 = vmatpush1.bf16.msra.mxu0 %v422
        %536 = vmatprep.subr.bf16.mxu0 %v427
        %537 = vmatpush1.bf16.msra.mxu0 %v426
        %538 = vmatprep.subr.bf16.mxu0 0
        %539 = vmatpush1.bf16.msra.mxu0 0
        %540 = vmatprep.subr.bf16.mxu0 0
        %541 = vmatpush1.bf16.msra.mxu0 0
        %542 = vmatprep.subr.bf16.mxu0 0
        %543 = vmatpush1.bf16.msra.mxu0 0
        %544 = vmatprep.subr.bf16.mxu0 0
        %545 = vmatpush1.bf16.msra.mxu0 0
        %546 = vmatprep.subr.bf16.mxu0 0
        %547 = vmatpush1.bf16.msra.mxu0 0
        %548 = vmatprep.subr.bf16.mxu0 0
        %549 = vmatpush1.bf16.msra.mxu0 0
        %550 = vmatprep.subr.bf16.mxu0 0
        %551 = vmatpush1.bf16.msra.mxu0 0
        %552 = vmatprep.subr.bf16.mxu0 0
        %553 = vmatpush1.bf16.msra.mxu0 0
        %554 = vmatprep.subr.bf16.mxu0 0
        %555 = vmatpush1.bf16.msra.mxu0 0
        %556 = vmatprep.subr.bf16.mxu0 0
        %557 = vmatpush1.bf16.msra.mxu0 0
        %558 = vmatprep.subr.bf16.mxu0 0
        %559 = vmatpush1.bf16.msra.mxu0 0
        %560 = vmatprep.subr.bf16.mxu0 0
        %561 = vmatpush1.bf16.msra.mxu0 0
        %562 = vmatprep.mubr.bf16.mxu0 0
        %563 = vmatmul.mubr.bf16.gmra.mrb[0].mxu0 %v446
        %v564 = vpop.f32.mrb[0].mxu0
        %v565 = vadd.f32 %v307, %v564
        %v566 = vpop.f32.mrb[0].mxu0
        %v567 = vadd.f32 %v307, %v566
        %v568 = vpop.f32.mrb[0].mxu0
        %v569 = vadd.f32 %v312, %v568
        %v570 = vpop.f32.mrb[0].mxu0
        %v571 = vadd.f32 %v312, %v570
        %572 = vmatprep.mubr.bf16.mxu0 0
        %573 = vmatmul.mubr.bf16.gmra.mrb[0].mxu0 %v449
        %v574 = vpop.f32.mrb[0].mxu0
        %v575 = vadd.f32 %v317, %v574
        %v576 = vpop.f32.mrb[0].mxu0
        %v577 = vadd.f32 %v317, %v576
        %v578 = vpop.f32.mrb[0].mxu0
        %v579 = vadd.f32 %v322, %v578
        %v580 = vpop.f32.mrb[0].mxu0
        %v581 = vadd.f32 %v322, %v580
        %582 = vmatprep.mubr.bf16.mxu0 0
        %583 = vmatmul.mubr.bf16.gmra.mrb[0].mxu0 %v452
        %v584 = vpop.f32.mrb[0].mxu0
        %v585 = vadd.f32 %v327, %v584
        %v586 = vpop.f32.mrb[0].mxu0
        %v587 = vadd.f32 %v327, %v586
        %v588 = vpop.f32.mrb[0].mxu0
        %v589 = vadd.f32 %v332, %v588
        %v590 = vpop.f32.mrb[0].mxu0
        %v591 = vadd.f32 %v332, %v590
        %592 = vmatprep.mubr.bf16.mxu0 0
        %593 = vmatmul.mubr.bf16.gmra.mrb[0].mxu0 %v455
        %v594 = vpop.f32.mrb[0].mxu0
        %v595 = vadd.f32 %v337, %v594
        %v596 = vpop.f32.mrb[0].mxu0
        %v597 = vadd.f32 %v337, %v596
        %v598 = vpop.f32.mrb[0].mxu0
        %v599 = vadd.f32 %v342, %v598
        %v600 = vpop.f32.mrb[0].mxu0
        %v601 = vadd.f32 %v342, %v600
        %602 = vdwg.mxu0
        %v603 = vmax.f32 %v492, 0.0
        %v604 = vmax.f32 %v494, 0.0
        %v605 = vmax.f32 %v565, 0.0
        %v606 = vmax.f32 %v567, 0.0
        %v607 = vmax.f32 %v496, 0.0
        %v608 = vmax.f32 %v498, 0.0
        %v609 = vmax.f32 %v569, 0.0
        %v610 = vmax.f32 %v571, 0.0
        %v611 = vmax.f32 %v502, 0.0
        %v612 = vmax.f32 %v504, 0.0
        %v613 = vmax.f32 %v575, 0.0
        %v614 = vmax.f32 %v577, 0.0
        %v615 = vmax.f32 %v506, 0.0
        %v616 = vmax.f32 %v508, 0.0
        %v617 = vmax.f32 %v579, 0.0
        %v618 = vmax.f32 %v581, 0.0
        %v619 = vmax.f32 %v512, 0.0
        %v620 = vmax.f32 %v514, 0.0
        %v621 = vmax.f32 %v585, 0.0
        %v622 = vmax.f32 %v587, 0.0
        %v623 = vmax.f32 %v516, 0.0
        %v624 = vmax.f32 %v518, 0.0
        %v625 = vmax.f32 %v589, 0.0
        %v626 = vmax.f32 %v591, 0.0
        %v627 = vmax.f32 %v522, 0.0
        %v628 = vmax.f32 %v524, 0.0
        %v629 = vmax.f32 %v595, 0.0
        %v630 = vmax.f32 %v597, 0.0
        %v631 = vmax.f32 %v526, 0.0
        %v632 = vmax.f32 %v528, 0.0
        %v633 = vmax.f32 %v599, 0.0
        %v634 = vmax.f32 %v601, 0.0
        %v635 = vld [vmem:[%s3] sm:$0xff]
        %v636 = vld [vmem:[%s3 + $0x8] sm:$0xff]
        %v637 = vld [vmem:[%s3 + $0x10] sm:$0xff]
        %v638 = vld [vmem:[%s3 + $0x18] sm:$0xff]
        %v639 = vld [vmem:[%s3 + $0x20] sm:$0xff]
        %v640 = vld [vmem:[%s3 + $0x28] sm:$0xff]
        %v641 = vld [vmem:[%s3 + $0x30] sm:$0xff]
        %v642 = vld [vmem:[%s3 + $0x38] sm:$0xff]
        %v643 = vld [vmem:[%s4] sm:$0xff]
        %v644 = vld [vmem:[%s4 + $0x8] sm:$0xff]
        %v645 = vld [vmem:[%s4 + $0x10] sm:$0xff]
        %v646 = vld [vmem:[%s4 + $0x18] sm:$0xff]
        %v647 = vld [vmem:[%s4 + $0x20] sm:$0xff]
        %v648 = vld [vmem:[%s4 + $0x28] sm:$0xff]
        %v649 = vld [vmem:[%s4 + $0x30] sm:$0xff]
        %v650 = vld [vmem:[%s4 + $0x38] sm:$0xff]
        %652 = vset.pattern.permute.xlu0 0
        %653 = vperm.xlu0 %652, %v643
        %v654 = vpop.permute.xlu0 %653
        %657 = vset.pattern.permute.xlu0 0
        %658 = vperm.xlu0 %657, %v644
        %v659 = vpop.permute.xlu0 %658
        %662 = vset.pattern.permute.xlu0 0
        %663 = vperm.xlu0 %662, %v645
        %v664 = vpop.permute.xlu0 %663
        %667 = vset.pattern.permute.xlu0 0
        %668 = vperm.xlu0 %667, %v646
        %v669 = vpop.permute.xlu0 %668
        %672 = vset.pattern.permute.xlu0 0
        %673 = vperm.xlu0 %672, %v647
        %v674 = vpop.permute.xlu0 %673
        %677 = vset.pattern.permute.xlu0 0
        %678 = vperm.xlu0 %677, %v648
        %v679 = vpop.permute.xlu0 %678
        %682 = vset.pattern.permute.xlu0 0
        %683 = vperm.xlu0 %682, %v649
        %v684 = vpop.permute.xlu0 %683
        %687 = vset.pattern.permute.xlu0 0
        %688 = vperm.xlu0 %687, %v650
        %v689 = vpop.permute.xlu0 %688
        %v692 = vsel %vm444, %v635, 0
        %v695 = vsel %vm444, %v636, 0
        %v698 = vsel %vm444, %v637, 0
        %v701 = vsel %vm444, %v638, 0
        %v704 = vsel %vm444, %v639, 0
        %v707 = vsel %vm444, %v640, 0
        %v710 = vsel %vm444, %v641, 0
        %v713 = vsel %vm444, %v642, 0
        %715 = vmatprep.subr.mxu0 %v604
        %716 = vmatpush1.msra.mxu0 %v603
        %717 = vmatprep.subr.mxu0 %v608
        %718 = vmatpush1.msra.mxu0 %v607
        %719 = vmatprep.subr.mxu0 %v612
        %720 = vmatpush1.msra.mxu0 %v611
        %721 = vmatprep.subr.mxu0 %v616
        %722 = vmatpush1.msra.mxu0 %v615
        %723 = vmatprep.subr.mxu0 %v620
        %724 = vmatpush1.msra.mxu0 %v619
        %725 = vmatprep.subr.mxu0 %v624
        %726 = vmatpush1.msra.mxu0 %v623
        %727 = vmatprep.subr.mxu0 %v628
        %728 = vmatpush1.msra.mxu0 %v627
        %729 = vmatprep.subr.mxu0 %v632
        %730 = vmatpush1.msra.mxu0 %v631
        %731 = vmatprep.subr.mxu0 0.0
        %732 = vmatpush1.msra.mxu0 0.0
        %733 = vmatprep.subr.mxu0 0.0
        %734 = vmatpush1.msra.mxu0 0.0
        %735 = vmatprep.subr.mxu0 0.0
        %736 = vmatpush1.msra.mxu0 0.0
        %737 = vmatprep.subr.mxu0 0.0
        %738 = vmatpush1.msra.mxu0 0.0
        %739 = vmatprep.subr.mxu0 0.0
        %740 = vmatpush1.msra.mxu0 0.0
        %741 = vmatprep.subr.mxu0 0.0
        %742 = vmatpush1.msra.mxu0 0.0
        %743 = vmatprep.subr.mxu0 0.0
        %744 = vmatpush1.msra.mxu0 0.0
        %745 = vmatprep.subr.mxu0 0.0
        %746 = vmatpush1.msra.mxu0 0.0
        %747 = vmatprep.subr.mxu0 0.0
        %748 = vmatpush1.msra.mxu0 0.0
        %749 = vmatprep.subr.mxu0 0.0
        %750 = vmatpush1.msra.mxu0 0.0
        %751 = vmatprep.subr.mxu0 0.0
        %752 = vmatpush1.msra.mxu0 0.0
        %753 = vmatprep.subr.mxu0 0.0
        %754 = vmatpush1.msra.mxu0 0.0
        %755 = vmatprep.subr.mxu0 0.0
        %756 = vmatpush1.msra.mxu0 0.0
        %757 = vmatprep.subr.mxu0 0.0
        %758 = vmatpush1.msra.mxu0 0.0
        %759 = vmatprep.subr.mxu0 0.0
        %760 = vmatpush1.msra.mxu0 0.0
        %761 = vmatprep.subr.mxu0 0.0
        %762 = vmatpush1.msra.mxu0 0.0
        %763 = vmatprep.subr.mxu0 0.0
        %764 = vmatpush1.msra.mxu0 0.0
        %765 = vmatprep.subr.mxu0 0.0
        %766 = vmatpush1.msra.mxu0 0.0
        %767 = vmatprep.subr.mxu0 0.0
        %768 = vmatpush1.msra.mxu0 0.0
        %769 = vmatprep.subr.mxu0 0.0
        %770 = vmatpush1.msra.mxu0 0.0
        %771 = vmatprep.subr.mxu0 0.0
        %772 = vmatpush1.msra.mxu0 0.0
        %773 = vmatprep.subr.mxu0 0.0
        %774 = vmatpush1.msra.mxu0 0.0
        %775 = vmatprep.subr.mxu0 0.0
        %776 = vmatpush1.msra.mxu0 0.0
        %777 = vmatprep.subr.mxu0 0.0
        %778 = vmatpush1.msra.mxu0 0.0
        %779 = vmatprep.mubr.f32.mxu0 0.0
        %780 = vmatmul.mubr.f32.gmra.mrb[0].mxu0 %v692
        %v781 = vpop.f32.mrb[0].mxu0
        %v782 = vadd.f32 %v654, %v781
        %v783 = vpop.f32.mrb[0].mxu0
        %v784 = vadd.f32 %v654, %v783
        %785 = vmatprep.mubr.f32.mxu0 0.0
        %786 = vmatmul.mubr.f32.gmra.mrb[0].mxu0 %v695
        %v787 = vpop.f32.mrb[0].mxu0
        %v788 = vadd.f32 %v659, %v787
        %v789 = vpop.f32.mrb[0].mxu0
        %v790 = vadd.f32 %v659, %v789
        %791 = vmatprep.mubr.f32.mxu0 0.0
        %792 = vmatmul.mubr.f32.gmra.mrb[0].mxu0 %v698
        %v793 = vpop.f32.mrb[0].mxu0
        %v794 = vadd.f32 %v664, %v793
        %v795 = vpop.f32.mrb[0].mxu0
        %v796 = vadd.f32 %v664, %v795
        %797 = vmatprep.mubr.f32.mxu0 0.0
        %798 = vmatmul.mubr.f32.gmra.mrb[0].mxu0 %v701
        %v799 = vpop.f32.mrb[0].mxu0
        %v800 = vadd.f32 %v669, %v799
        %v801 = vpop.f32.mrb[0].mxu0
        %v802 = vadd.f32 %v669, %v801
        %803 = vmatprep.mubr.f32.mxu0 0.0
        %804 = vmatmul.mubr.f32.gmra.mrb[0].mxu0 %v704
        %v805 = vpop.f32.mrb[0].mxu0
        %v806 = vadd.f32 %v674, %v805
        %v807 = vpop.f32.mrb[0].mxu0
        %v808 = vadd.f32 %v674, %v807
        %809 = vmatprep.mubr.f32.mxu0 0.0
        %810 = vmatmul.mubr.f32.gmra.mrb[0].mxu0 %v707
        %v811 = vpop.f32.mrb[0].mxu0
        %v812 = vadd.f32 %v679, %v811
        %v813 = vpop.f32.mrb[0].mxu0
        %v814 = vadd.f32 %v679, %v813
        %815 = vmatprep.mubr.f32.mxu0 0.0
        %816 = vmatmul.mubr.f32.gmra.mrb[0].mxu0 %v710
        %v817 = vpop.f32.mrb[0].mxu0
        %v818 = vadd.f32 %v684, %v817
        %v819 = vpop.f32.mrb[0].mxu0
        %v820 = vadd.f32 %v684, %v819
        %821 = vmatprep.mubr.f32.mxu0 0.0
        %822 = vmatmul.mubr.f32.gmra.mrb[0].mxu0 %v713
        %v823 = vpop.f32.mrb[0].mxu0
        %v824 = vadd.f32 %v689, %v823
        %v825 = vpop.f32.mrb[0].mxu0
        %v826 = vadd.f32 %v689, %v825
        %827 = vdwg.mxu0
        %828 = vmatprep.subr.mxu0 %v606
        %829 = vmatpush1.msra.mxu0 %v605
        %830 = vmatprep.subr.mxu0 %v610
        %831 = vmatpush1.msra.mxu0 %v609
        %832 = vmatprep.subr.mxu0 %v614
        %833 = vmatpush1.msra.mxu0 %v613
        %834 = vmatprep.subr.mxu0 %v618
        %835 = vmatpush1.msra.mxu0 %v617
        %836 = vmatprep.subr.mxu0 %v622
        %837 = vmatpush1.msra.mxu0 %v621
        %838 = vmatprep.subr.mxu0 %v626
        %839 = vmatpush1.msra.mxu0 %v625
        %840 = vmatprep.subr.mxu0 %v630
        %841 = vmatpush1.msra.mxu0 %v629
        %842 = vmatprep.subr.mxu0 %v634
        %843 = vmatpush1.msra.mxu0 %v633
        %844 = vmatprep.subr.mxu0 0.0
        %845 = vmatpush1.msra.mxu0 0.0
        %846 = vmatprep.subr.mxu0 0.0
        %847 = vmatpush1.msra.mxu0 0.0
        %848 = vmatprep.subr.mxu0 0.0
        %849 = vmatpush1.msra.mxu0 0.0
        %850 = vmatprep.subr.mxu0 0.0
        %851 = vmatpush1.msra.mxu0 0.0
        %852 = vmatprep.subr.mxu0 0.0
        %853 = vmatpush1.msra.mxu0 0.0
        %854 = vmatprep.subr.mxu0 0.0
        %855 = vmatpush1.msra.mxu0 0.0
        %856 = vmatprep.subr.mxu0 0.0
        %857 = vmatpush1.msra.mxu0 0.0
        %858 = vmatprep.subr.mxu0 0.0
        %859 = vmatpush1.msra.mxu0 0.0
        %860 = vmatprep.subr.mxu0 0.0
        %861 = vmatpush1.msra.mxu0 0.0
        %862 = vmatprep.subr.mxu0 0.0
        %863 = vmatpush1.msra.mxu0 0.0
        %864 = vmatprep.subr.mxu0 0.0
        %865 = vmatpush1.msra.mxu0 0.0
        %866 = vmatprep.subr.mxu0 0.0
        %867 = vmatpush1.msra.mxu0 0.0
        %868 = vmatprep.subr.mxu0 0.0
        %869 = vmatpush1.msra.mxu0 0.0
        %870 = vmatprep.subr.mxu0 0.0
        %871 = vmatpush1.msra.mxu0 0.0
        %872 = vmatprep.subr.mxu0 0.0
        %873 = vmatpush1.msra.mxu0 0.0
        %874 = vmatprep.subr.mxu0 0.0
        %875 = vmatpush1.msra.mxu0 0.0
        %876 = vmatprep.subr.mxu0 0.0
        %877 = vmatpush1.msra.mxu0 0.0
        %878 = vmatprep.subr.mxu0 0.0
        %879 = vmatpush1.msra.mxu0 0.0
        %880 = vmatprep.subr.mxu0 0.0
        %881 = vmatpush1.msra.mxu0 0.0
        %882 = vmatprep.subr.mxu0 0.0
        %883 = vmatpush1.msra.mxu0 0.0
        %884 = vmatprep.subr.mxu0 0.0
        %885 = vmatpush1.msra.mxu0 0.0
        %886 = vmatprep.subr.mxu0 0.0
        %887 = vmatpush1.msra.mxu0 0.0
        %888 = vmatprep.subr.mxu0 0.0
        %889 = vmatpush1.msra.mxu0 0.0
        %890 = vmatprep.subr.mxu0 0.0
        %891 = vmatpush1.msra.mxu0 0.0
        %892 = vmatprep.mubr.f32.mxu0 0.0
        %893 = vmatmul.mubr.f32.gmra.mrb[0].mxu0 %v692
        %v894 = vpop.f32.mrb[0].mxu0
        %v895 = vadd.f32 %v654, %v894
        %v896 = vpop.f32.mrb[0].mxu0
        %v897 = vadd.f32 %v654, %v896
        %898 = vmatprep.mubr.f32.mxu0 0.0
        %899 = vmatmul.mubr.f32.gmra.mrb[0].mxu0 %v695
        %v900 = vpop.f32.mrb[0].mxu0
        %v901 = vadd.f32 %v659, %v900
        %v902 = vpop.f32.mrb[0].mxu0
        %v903 = vadd.f32 %v659, %v902
        %904 = vmatprep.mubr.f32.mxu0 0.0
        %905 = vmatmul.mubr.f32.gmra.mrb[0].mxu0 %v698
        %v906 = vpop.f32.mrb[0].mxu0
        %v907 = vadd.f32 %v664, %v906
        %v908 = vpop.f32.mrb[0].mxu0
        %v909 = vadd.f32 %v664, %v908
        %910 = vmatprep.mubr.f32.mxu0 0.0
        %911 = vmatmul.mubr.f32.gmra.mrb[0].mxu0 %v701
        %v912 = vpop.f32.mrb[0].mxu0
        %v913 = vadd.f32 %v669, %v912
        %v914 = vpop.f32.mrb[0].mxu0
        %v915 = vadd.f32 %v669, %v914
        %916 = vmatprep.mubr.f32.mxu0 0.0
        %917 = vmatmul.mubr.f32.gmra.mrb[0].mxu0 %v704
        %v918 = vpop.f32.mrb[0].mxu0
        %v919 = vadd.f32 %v674, %v918
        %v920 = vpop.f32.mrb[0].mxu0
        %v921 = vadd.f32 %v674, %v920
        %922 = vmatprep.mubr.f32.mxu0 0.0
        %923 = vmatmul.mubr.f32.gmra.mrb[0].mxu0 %v707
        %v924 = vpop.f32.mrb[0].mxu0
        %v925 = vadd.f32 %v679, %v924
        %v926 = vpop.f32.mrb[0].mxu0
        %v927 = vadd.f32 %v679, %v926
        %928 = vmatprep.mubr.f32.mxu0 0.0
        %929 = vmatmul.mubr.f32.gmra.mrb[0].mxu0 %v710
        %v930 = vpop.f32.mrb[0].mxu0
        %v931 = vadd.f32 %v684, %v930
        %v932 = vpop.f32.mrb[0].mxu0
        %v933 = vadd.f32 %v684, %v932
        %934 = vmatprep.mubr.f32.mxu0 0.0
        %935 = vmatmul.mubr.f32.gmra.mrb[0].mxu0 %v713
        %v936 = vpop.f32.mrb[0].mxu0
        %v937 = vadd.f32 %v689, %v936
        %v938 = vpop.f32.mrb[0].mxu0
        %v939 = vadd.f32 %v689, %v938
        %940 = vdwg.mxu0
        %v941 = vmax.f32 %v782, %v788
        %v942 = vmax.f32 %v941, %v794
        %v943 = vmax.f32 %v942, %v800
        %v944 = vmax.f32 %v943, %v806
        %v945 = vmax.f32 %v944, %v812
        %v946 = vmax.f32 %v945, %v818
        %v947 = vmax.f32 %v946, %v824
        %v948 = vrot.slane %v947, 4
        %v949 = vmax.f32 %v947, %v948
        %v950 = vrot.slane %v949, 2
        %v951 = vmax.f32 %v949, %v950
        %v952 = vrot.slane %v951, 1
        %v953 = vmax.f32 %v951, %v952
        %v954 = vmax.f32 %v784, %v790
        %v955 = vmax.f32 %v954, %v796
        %v956 = vmax.f32 %v955, %v802
        %v957 = vmax.f32 %v956, %v808
        %v958 = vmax.f32 %v957, %v814
        %v959 = vmax.f32 %v958, %v820
        %v960 = vmax.f32 %v959, %v826
        %v961 = vrot.slane %v960, 4
        %v962 = vmax.f32 %v960, %v961
        %v963 = vrot.slane %v962, 2
        %v964 = vmax.f32 %v962, %v963
        %v965 = vrot.slane %v964, 1
        %v966 = vmax.f32 %v964, %v965
        %v967 = vmax.f32 %v895, %v901
        %v968 = vmax.f32 %v967, %v907
        %v969 = vmax.f32 %v968, %v913
        %v970 = vmax.f32 %v969, %v919
        %v971 = vmax.f32 %v970, %v925
        %v972 = vmax.f32 %v971, %v931
        %v973 = vmax.f32 %v972, %v937
        %v974 = vrot.slane %v973, 4
        %v975 = vmax.f32 %v973, %v974
        %v976 = vrot.slane %v975, 2
        %v977 = vmax.f32 %v975, %v976
        %v978 = vrot.slane %v977, 1
        %v979 = vmax.f32 %v977, %v978
        %v980 = vmax.f32 %v897, %v903
        %v981 = vmax.f32 %v980, %v909
        %v982 = vmax.f32 %v981, %v915
        %v983 = vmax.f32 %v982, %v921
        %v984 = vmax.f32 %v983, %v927
        %v985 = vmax.f32 %v984, %v933
        %v986 = vmax.f32 %v985, %v939
        %v987 = vrot.slane %v986, 4
        %v988 = vmax.f32 %v986, %v987
        %v989 = vrot.slane %v988, 2
        %v990 = vmax.f32 %v988, %v989
        %v991 = vrot.slane %v990, 1
        %v992 = vmax.f32 %v990, %v991
        %v993 = vsub.f32 %v782, %v953
        %v994 = vsub.f32 %v784, %v966
        %v995 = vsub.f32 %v895, %v979
        %v996 = vsub.f32 %v897, %v992
        %v997 = vsub.f32 %v788, %v953
        %v998 = vsub.f32 %v790, %v966
        %v999 = vsub.f32 %v901, %v979
        %v1000 = vsub.f32 %v903, %v992
        %v1001 = vsub.f32 %v794, %v953
        %v1002 = vsub.f32 %v796, %v966
        %v1003 = vsub.f32 %v907, %v979
        %v1004 = vsub.f32 %v909, %v992
        %v1005 = vsub.f32 %v800, %v953
        %v1006 = vsub.f32 %v802, %v966
        %v1007 = vsub.f32 %v913, %v979
        %v1008 = vsub.f32 %v915, %v992
        %v1009 = vsub.f32 %v806, %v953
        %v1010 = vsub.f32 %v808, %v966
        %v1011 = vsub.f32 %v919, %v979
        %v1012 = vsub.f32 %v921, %v992
        %v1013 = vsub.f32 %v812, %v953
        %v1014 = vsub.f32 %v814, %v966
        %v1015 = vsub.f32 %v925, %v979
        %v1016 = vsub.f32 %v927, %v992
        %v1017 = vsub.f32 %v818, %v953
        %v1018 = vsub.f32 %v820, %v966
        %v1019 = vsub.f32 %v931, %v979
        %v1020 = vsub.f32 %v933, %v992
        %v1021 = vsub.f32 %v824, %v953
        %v1022 = vsub.f32 %v826, %v966
        %v1023 = vsub.f32 %v937, %v979
        %v1024 = vsub.f32 %v939, %v992
        %v1025 = vmul.f32 %v993, 1.442695
        %v1026 = vpow.pop %v1025
        %v1027 = vmul.f32 %v994, 1.442695
        %v1028 = vpow.pop %v1027
        %v1029 = vmul.f32 %v995, 1.442695
        %v1030 = vpow.pop %v1029
        %v1031 = vmul.f32 %v996, 1.442695
        %v1032 = vpow.pop %v1031
        %v1033 = vmul.f32 %v997, 1.442695
        %v1034 = vpow.pop %v1033
        %v1035 = vmul.f32 %v998, 1.442695
        %v1036 = vpow.pop %v1035
        %v1037 = vmul.f32 %v999, 1.442695
        %v1038 = vpow.pop %v1037
        %v1039 = vmul.f32 %v1000, 1.442695
        %v1040 = vpow.pop %v1039
        %v1041 = vmul.f32 %v1001, 1.442695
        %v1042 = vpow.pop %v1041
        %v1043 = vmul.f32 %v1002, 1.442695
        %v1044 = vpow.pop %v1043
        %v1045 = vmul.f32 %v1003, 1.442695
        %v1046 = vpow.pop %v1045
        %v1047 = vmul.f32 %v1004, 1.442695
        %v1048 = vpow.pop %v1047
        %v1049 = vmul.f32 %v1005, 1.442695
        %v1050 = vpow.pop %v1049
        %v1051 = vmul.f32 %v1006, 1.442695
        %v1052 = vpow.pop %v1051
        %v1053 = vmul.f32 %v1007, 1.442695
        %v1054 = vpow.pop %v1053
        %v1055 = vmul.f32 %v1008, 1.442695
        %v1056 = vpow.pop %v1055
        %v1057 = vmul.f32 %v1009, 1.442695
        %v1058 = vpow.pop %v1057
        %v1059 = vmul.f32 %v1010, 1.442695
        %v1060 = vpow.pop %v1059
        %v1061 = vmul.f32 %v1011, 1.442695
        %v1062 = vpow.pop %v1061
        %v1063 = vmul.f32 %v1012, 1.442695
        %v1064 = vpow.pop %v1063
        %v1065 = vmul.f32 %v1013, 1.442695
        %v1066 = vpow.pop %v1065
        %v1067 = vmul.f32 %v1014, 1.442695
        %v1068 = vpow.pop %v1067
        %v1069 = vmul.f32 %v1015, 1.442695
        %v1070 = vpow.pop %v1069
        %v1071 = vmul.f32 %v1016, 1.442695
        %v1072 = vpow.pop %v1071
        %v1073 = vmul.f32 %v1017, 1.442695
        %v1074 = vpow.pop %v1073
        %v1075 = vmul.f32 %v1018, 1.442695
        %v1076 = vpow.pop %v1075
        %v1077 = vmul.f32 %v1019, 1.442695
        %v1078 = vpow.pop %v1077
        %v1079 = vmul.f32 %v1020, 1.442695
        %v1080 = vpow.pop %v1079
        %v1081 = vmul.f32 %v1021, 1.442695
        %v1082 = vpow.pop %v1081
        %v1083 = vmul.f32 %v1022, 1.442695
        %v1084 = vpow.pop %v1083
        %v1085 = vmul.f32 %v1023, 1.442695
        %v1086 = vpow.pop %v1085
        %v1087 = vmul.f32 %v1024, 1.442695
        %v1088 = vpow.pop %v1087
        %v1089 = vadd.f32 %v1026, %v1034
        %v1090 = vadd.f32 %v1089, %v1042
        %v1091 = vadd.f32 %v1090, %v1050
        %v1092 = vadd.f32 %v1091, %v1058
        %v1093 = vadd.f32 %v1092, %v1066
        %v1094 = vadd.f32 %v1093, %v1074
        %v1095 = vadd.f32 %v1094, %v1082
        %v1096 = vrot.slane %v1095, 4
        %v1097 = vadd.f32 %v1095, %v1096
        %v1098 = vrot.slane %v1097, 2
        %v1099 = vadd.f32 %v1097, %v1098
        %v1100 = vrot.slane %v1099, 1
        %v1101 = vadd.f32 %v1099, %v1100
        %v1102 = vadd.f32 %v1028, %v1036
        %v1103 = vadd.f32 %v1102, %v1044
        %v1104 = vadd.f32 %v1103, %v1052
        %v1105 = vadd.f32 %v1104, %v1060
        %v1106 = vadd.f32 %v1105, %v1068
        %v1107 = vadd.f32 %v1106, %v1076
        %v1108 = vadd.f32 %v1107, %v1084
        %v1109 = vrot.slane %v1108, 4
        %v1110 = vadd.f32 %v1108, %v1109
        %v1111 = vrot.slane %v1110, 2
        %v1112 = vadd.f32 %v1110, %v1111
        %v1113 = vrot.slane %v1112, 1
        %v1114 = vadd.f32 %v1112, %v1113
        %v1115 = vadd.f32 %v1030, %v1038
        %v1116 = vadd.f32 %v1115, %v1046
        %v1117 = vadd.f32 %v1116, %v1054
        %v1118 = vadd.f32 %v1117, %v1062
        %v1119 = vadd.f32 %v1118, %v1070
        %v1120 = vadd.f32 %v1119, %v1078
        %v1121 = vadd.f32 %v1120, %v1086
        %v1122 = vrot.slane %v1121, 4
        %v1123 = vadd.f32 %v1121, %v1122
        %v1124 = vrot.slane %v1123, 2
        %v1125 = vadd.f32 %v1123, %v1124
        %v1126 = vrot.slane %v1125, 1
        %v1127 = vadd.f32 %v1125, %v1126
        %v1128 = vadd.f32 %v1032, %v1040
        %v1129 = vadd.f32 %v1128, %v1048
        %v1130 = vadd.f32 %v1129, %v1056
        %v1131 = vadd.f32 %v1130, %v1064
        %v1132 = vadd.f32 %v1131, %v1072
        %v1133 = vadd.f32 %v1132, %v1080
        %v1134 = vadd.f32 %v1133, %v1088
        %v1135 = vrot.slane %v1134, 4
        %v1136 = vadd.f32 %v1134, %v1135
        %v1137 = vrot.slane %v1136, 2
        %v1138 = vadd.f32 %v1136, %v1137
        %v1139 = vrot.slane %v1138, 1
        %v1140 = vadd.f32 %v1138, %v1139
        %v1141 = vrcp.pop %v1101
        %v1142 = vrcp.pop %v1114
        %v1143 = vrcp.pop %v1127
        %v1144 = vrcp.pop %v1140
        %v1145 = vmul.f32 %v1026, %v1141
        %v1146 = vmul.f32 %v1028, %v1142
        %v1147 = vmul.f32 %v1030, %v1143
        %v1148 = vmul.f32 %v1032, %v1144
        %v1149 = vmul.f32 %v1034, %v1141
        %v1150 = vmul.f32 %v1036, %v1142
        %v1151 = vmul.f32 %v1038, %v1143
        %v1152 = vmul.f32 %v1040, %v1144
        %v1153 = vmul.f32 %v1042, %v1141
        %v1154 = vmul.f32 %v1044, %v1142
        %v1155 = vmul.f32 %v1046, %v1143
        %v1156 = vmul.f32 %v1048, %v1144
        %v1157 = vmul.f32 %v1050, %v1141
        %v1158 = vmul.f32 %v1052, %v1142
        %v1159 = vmul.f32 %v1054, %v1143
        %v1160 = vmul.f32 %v1056, %v1144
        %v1161 = vmul.f32 %v1058, %v1141
        %v1162 = vmul.f32 %v1060, %v1142
        %v1163 = vmul.f32 %v1062, %v1143
        %v1164 = vmul.f32 %v1064, %v1144
        %v1165 = vmul.f32 %v1066, %v1141
        %v1166 = vmul.f32 %v1068, %v1142
        %v1167 = vmul.f32 %v1070, %v1143
        %v1168 = vmul.f32 %v1072, %v1144
        %v1169 = vmul.f32 %v1074, %v1141
        %v1170 = vmul.f32 %v1076, %v1142
        %v1171 = vmul.f32 %v1078, %v1143
        %v1172 = vmul.f32 %v1080, %v1144
        %v1173 = vmul.f32 %v1082, %v1141
        %v1174 = vmul.f32 %v1084, %v1142
        %v1175 = vmul.f32 %v1086, %v1143
        %v1176 = vmul.f32 %v1088, %v1144
        %v1177 = vpack.c.bf16 %v1149, %v1145
        %v1178 = vpack.c.bf16 %v1150, %v1146
        %v1179 = vpack.c.bf16 %v1151, %v1147
        %v1180 = vpack.c.bf16 %v1152, %v1148
        %v1181 = vpack.c.bf16 %v1157, %v1153
        %v1182 = vpack.c.bf16 %v1158, %v1154
        %v1183 = vpack.c.bf16 %v1159, %v1155
        %v1184 = vpack.c.bf16 %v1160, %v1156
        %v1185 = vpack.c.bf16 %v1165, %v1161
        %v1186 = vpack.c.bf16 %v1166, %v1162
        %v1187 = vpack.c.bf16 %v1167, %v1163
        %v1188 = vpack.c.bf16 %v1168, %v1164
        %v1189 = vpack.c.bf16 %v1173, %v1169
        %v1190 = vpack.c.bf16 %v1174, %v1170
        %v1191 = vpack.c.bf16 %v1175, %v1171
        %v1192 = vpack.c.bf16 %v1176, %v1172
        %v1209 = vunpack.c.l.b16 %v1177
        %v1210 = vunpack.c.l.b16 %v1178
        %v1211 = vunpack.c.l.b16 %v1179
        %v1212 = vunpack.c.l.b16 %v1180
        %v1213 = vunpack.c.h.b16 %v1177
        %v1214 = vunpack.c.h.b16 %v1178
        %v1215 = vunpack.c.h.b16 %v1179
        %v1216 = vunpack.c.h.b16 %v1180
        %v1217 = vunpack.c.l.b16 %v1181
        %v1218 = vunpack.c.l.b16 %v1182
        %v1219 = vunpack.c.l.b16 %v1183
        %v1220 = vunpack.c.l.b16 %v1184
        %v1221 = vunpack.c.h.b16 %v1181
        %v1222 = vunpack.c.h.b16 %v1182
        %v1223 = vunpack.c.h.b16 %v1183
        %v1224 = vunpack.c.h.b16 %v1184
        %v1225 = vunpack.c.l.b16 %v1185
        %v1226 = vunpack.c.l.b16 %v1186
        %v1227 = vunpack.c.l.b16 %v1187
        %v1228 = vunpack.c.l.b16 %v1188
        %v1229 = vunpack.c.h.b16 %v1185
        %v1230 = vunpack.c.h.b16 %v1186
        %v1231 = vunpack.c.h.b16 %v1187
        %v1232 = vunpack.c.h.b16 %v1188
        %v1233 = vunpack.c.l.b16 %v1189
        %v1234 = vunpack.c.l.b16 %v1190
        %v1235 = vunpack.c.l.b16 %v1191
        %v1236 = vunpack.c.l.b16 %v1192
        %v1237 = vunpack.c.h.b16 %v1189
        %v1238 = vunpack.c.h.b16 %v1190
        %v1239 = vunpack.c.h.b16 %v1191
        %v1240 = vunpack.c.h.b16 %v1192
        %v1241 = vpack.c.b16 %v1210, %v1209
        %v1242 = vpack.c.b16 %v1212, %v1211
        %v1243 = vpack.c.b16 %v1214, %v1213
        %v1244 = vpack.c.b16 %v1216, %v1215
        %v1245 = vpack.c.b16 %v1218, %v1217
        %v1246 = vpack.c.b16 %v1220, %v1219
        %v1247 = vpack.c.b16 %v1222, %v1221
        %v1248 = vpack.c.b16 %v1224, %v1223
        %v1249 = vpack.c.b16 %v1226, %v1225
        %v1250 = vpack.c.b16 %v1228, %v1227
        %v1251 = vpack.c.b16 %v1230, %v1229
        %v1252 = vpack.c.b16 %v1232, %v1231
        %v1253 = vpack.c.b16 %v1234, %v1233
        %v1254 = vpack.c.b16 %v1236, %v1235
        %v1255 = vpack.c.b16 %v1238, %v1237
        %v1256 = vpack.c.b16 %v1240, %v1239
        %1273 = vst [vmem:[%s268] sm:$0xff] %v1241
        %1274 = vst [vmem:[%s268 + $0x8] sm:$0xff] %v1242
        %1275 = vst [vmem:[%s268 + $0x10] sm:$0xff] %v1243
        %1276 = vst [vmem:[%s268 + $0x18] sm:$0xff] %v1244
        %1277 = vst [vmem:[%s268 + $0x20] sm:$0xff] %v1245
        %1278 = vst [vmem:[%s268 + $0x28] sm:$0xff] %v1246
        %1279 = vst [vmem:[%s268 + $0x30] sm:$0xff] %v1247
        %1280 = vst [vmem:[%s268 + $0x38] sm:$0xff] %v1248
        %1281 = vst [vmem:[%s268 + $0x40] sm:$0xff] %v1249
        %1282 = vst [vmem:[%s268 + $0x48] sm:$0xff] %v1250
        %1283 = vst [vmem:[%s268 + $0x50] sm:$0xff] %v1251
        %1284 = vst [vmem:[%s268 + $0x58] sm:$0xff] %v1252
        %1285 = vst [vmem:[%s268 + $0x60] sm:$0xff] %v1253
        %1286 = vst [vmem:[%s268 + $0x68] sm:$0xff] %v1254
        %1287 = vst [vmem:[%s268 + $0x70] sm:$0xff] %v1255
        %1288 = vst [vmem:[%s268 + $0x78] sm:$0xff] %v1256
        %s1289 = sand.u32 %s134, 1
        %s1290 = sand.u32 %s134, 1
        %s1291 = smul.addr %s1290, 128
        %s1292 = scalar_lea.vmem [#allocation3], %s1291
        // Predicated region
        $region64: #{model_forward.2} parent=58 // pred_check
          %p1293 = pneg %p144
        $region65: #{model_forward.2} parent=58 // pred_check_branch
          %1295 = sbr.rel (%p1293) target = $region67
        $region66: #{model_forward.2} parent=58 // pred_region
          %s1296 = smul.u32 4, %s16
          %s1297 = smul.addr %s1296, 4
          %s1298 = scalar_lea.vmem %s5, %s1297
          // Predicated region
          $region68: #{model_forward.2} parent=66 // pred_check
            _
          $region69: #{model_forward.2} parent=66 // pred_check_branch
            %1300 = sbr.rel (0) target = $region71
          $region70: #{model_forward.2} parent=66 // pred_region
            // Predicated region
            $region72: #{model_forward.2} parent=70 // pred_check
              _
            $region73: #{model_forward.2} parent=70 // pred_check_branch
              %1302 = sbr.rel (0) target = $region75
            $region74: #{model_forward.2} parent=70 // pred_region
              loop: start=0, step=1, limit=1
              $region76: #{model_forward.2} parent=74 // loop_pre_header
                _
              $region77: #{model_forward.2} parent=74 // loop_header
                %s1304 = sphi 0, %s1308
                %p1305 = scmp.ge.s32.totalorder %s1304, 1
                %s1309 = sphi %s1292, %s1292
                %s1310 = sphi %s1298, %s1298
              $region78: #{model_forward.2} parent=74 // loop_header_branch
                %1307 = sbr.rel (%p1305) target = $region82
              $region79: #{model_forward.2} parent=74 // loop_body
                %v1311 = vld [vmem:[%s1309] sm:$0xff]
                %1312 = vst [vmem:[%s1310] sm:$0xff] %v1311
                %v1313 = vld [vmem:[%s1309 + $0x8] sm:$0xff]
                %1314 = vst [vmem:[%s1310 + $0x8] sm:$0xff] %v1313
                %v1315 = vld [vmem:[%s1309 + $0x10] sm:$0xff]
                %1316 = vst [vmem:[%s1310 + $0x20] sm:$0xff] %v1315
                %v1317 = vld [vmem:[%s1309 + $0x18] sm:$0xff]
                %1318 = vst [vmem:[%s1310 + $0x28] sm:$0xff] %v1317
                %v1319 = vld [vmem:[%s1309 + $0x20] sm:$0xff]
                %1320 = vst [vmem:[%s1310 + $0x40] sm:$0xff] %v1319
                %v1321 = vld [vmem:[%s1309 + $0x28] sm:$0xff]
                %1322 = vst [vmem:[%s1310 + $0x48] sm:$0xff] %v1321
                %v1323 = vld [vmem:[%s1309 + $0x30] sm:$0xff]
                %1324 = vst [vmem:[%s1310 + $0x60] sm:$0xff] %v1323
                %v1325 = vld [vmem:[%s1309 + $0x38] sm:$0xff]
                %1326 = vst [vmem:[%s1310 + $0x68] sm:$0xff] %v1325
                %v1327 = vld [vmem:[%s1309 + $0x40] sm:$0xff]
                %1328 = vst [vmem:[%s1310 + $0x80] sm:$0xff] %v1327
                %v1329 = vld [vmem:[%s1309 + $0x48] sm:$0xff]
                %1330 = vst [vmem:[%s1310 + $0x88] sm:$0xff] %v1329
                %v1331 = vld [vmem:[%s1309 + $0x50] sm:$0xff]
                %1332 = vst [vmem:[%s1310 + $0xa0] sm:$0xff] %v1331
                %v1333 = vld [vmem:[%s1309 + $0x58] sm:$0xff]
                %1334 = vst [vmem:[%s1310 + $0xa8] sm:$0xff] %v1333
                %v1335 = vld [vmem:[%s1309 + $0x60] sm:$0xff]
                %1336 = vst [vmem:[%s1310 + $0xc0] sm:$0xff] %v1335
                %v1337 = vld [vmem:[%s1309 + $0x68] sm:$0xff]
                %1338 = vst [vmem:[%s1310 + $0xc8] sm:$0xff] %v1337
                %v1339 = vld [vmem:[%s1309 + $0x70] sm:$0xff]
                %1340 = vst [vmem:[%s1310 + $0xe0] sm:$0xff] %v1339
                %v1341 = vld [vmem:[%s1309 + $0x78] sm:$0xff]
                %1342 = vst [vmem:[%s1310 + $0xe8] sm:$0xff] %v1341
              $region80: #{model_forward.2} parent=74 // loop_footer
                %s1308 = sadd.s32 1, %s1304
              $region81: #{model_forward.2} parent=74 // loop_footer_branch
                %1303 = sbr.rel target = $region77
              $region82: #{model_forward.2} parent=74 // loop_exit
                _
            $region75: #{model_forward.2} parent=70 // pred_fallthru
              _
            // Predicated region
            $region83: #{model_forward.2} parent=70 // pred_check
              _
            $region84: #{model_forward.2} parent=70 // pred_check_branch
              %1344 = sbr.rel target = $region86
            $region85: #{model_forward.2} parent=70 // pred_region
              _
            $region86: #{model_forward.2} parent=70 // pred_fallthru
              _
          $region71: #{model_forward.2} parent=66 // pred_fallthru
            _
          %1345 = vnop
        $region67: #{model_forward.2} parent=58 // pred_fallthru
          _
      $region59: #{model_forward.2} parent=5 // pred_fallthru
        _
      %p1346 = scmp.le.s32.totalorder 2, %s11
      // Predicated region
      $region87: #{model_forward.2} parent=5 // pred_check
        %p1347 = pneg %p1346
      $region88: #{model_forward.2} parent=5 // pred_check_branch
        %1349 = sbr.rel (%p1347) target = $region90
      $region89: #{model_forward.2} parent=5 // pred_region
        %s1350 = ssub.s32 %s11, 2
        // Predicated region
        $region91: #{model_forward.2} parent=89 // pred_check
          %p1351 = pneg %p150
        $region92: #{model_forward.2} parent=89 // pred_check_branch
          %1353 = sbr.rel (%p1351) target = $region94
        $region93: #{model_forward.2} parent=89 // pred_region
          %s1354 = sand.u32 %s135, 1
          %s1355 = sand.u32 %s135, 1
          %s1356 = smul.addr %s1355, 128
          %s1357 = scalar_lea.vmem [#allocation3], %s1356
        $region94: #{model_forward.2} parent=89 // pred_fallthru
          _
      $region90: #{model_forward.2} parent=5 // pred_fallthru
        _
    $region6: #{model_forward.2} parent=1 // loop_footer
      %s15 = sadd.s32 1, %s11
    $region7: #{model_forward.2} parent=1 // loop_footer_branch
      %10 = sbr.rel target = $region3
    $region8: #{model_forward.2} parent=1 // loop_exit
      _

// kernel: model_forward.3
$region0: #{model_forward.3}
  #allocation0 [shape = 'u32[]', space=smem, size = 0x4, offset = 0x4, fixed_abs, tag = 'smem constant byte address 0x4 - core index']
  #allocation1 [shape = 'u32[144,128]{1,0:T(1,128)}', space=vmem, size = 0x12000, scoped, tag = 'internal scratch']
  %s0 = inlined_call_operand.vmem [shape: bf16[576,256], index: 0, kind: input, shape index: {}]
  %s1 = inlined_call_operand.vmem [shape: bf16[16,576], index: 1, kind: input, shape index: {}]
  %s2 = inlined_call_operand.vmem [shape: f32[16,1], index: 2, kind: input, shape index: {}]
  %s3 = inlined_call_operand.vmem [shape: f32[16,256], index: 3, kind: output, shape index: {}]
  %s4 = sld [smem:[#allocation0]]
  $region120: #{model_forward.3} parent=0
    _
  %s6 = ssub.s32 1, %s4
  %s7 = scalar_select 0, %s6, %s4
  $region1: #{model_forward.3} parent=0
    #allocation2 [shape = 'u8[294912]{0}', space=vmem, size = 0x48000, scoped, tag = 'input window, operand 0']
    #allocation3 [shape = 'u8[16384]{0}', space=vmem, size = 0x4000, scoped, tag = 'output window, operand 0']
    loop: start=0, step=1, limit=4
    $region2: #{model_forward.3} parent=1 // loop_pre_header
      _
    $region3: #{model_forward.3} parent=1 // loop_header
      %s9 = sphi 0, %s13
      %p10 = scmp.ge.s32.totalorder %s9, 4
      %s19 = sphi 0, %s21
      %s22 = sphi 0, %s19
      %s23 = sphi 0, %s22
      %s39 = sphi 0, %s23
      %s43 = sphi 0, %s43
      %s45 = sphi 0, %s43
      %s46 = sphi 0, %s45
      %s60 = sphi 0, %s46
      %s64 = sphi 0, %s64
      %s66 = sphi 0, %s64
      %s67 = sphi 0, %s66
      %s81 = sphi 0, %s67
      %s87 = sphi 0, %s89
      %s90 = sphi 0, %s87
      %s91 = sphi 0, %s90
      %s107 = sphi 0, %s91
    $region4: #{model_forward.3} parent=1 // loop_header_branch
      %12 = sbr.rel (%p10) target = $region8
    $region5: #{model_forward.3} parent=1 // loop_body
      %s14 = ssub.s32 %s9, 1
      %s15 = ssub.s32 %s9, 2
      %s16 = sadd.s32 %s9, 1
      %s17 = ssub.s32 %s9, %s16
      %p18 = scmp.eq.s32.totalorder %s17, 0
      %s20 = sadd.s32 %s19, 1
      %s21 = scalar_select %p18, %s19, %s20
      %p24 = pneg %p18
      %p25 = scmp.eq.s32.totalorder %s9, 1
      %p26 = por %p24, %p25
      %p27 = scmp.ne.s32.totalorder %s19, %s22
      %p28 = scmp.eq.s32.totalorder %s9, 0
      %p29 = por %p27, %p28
      %p30 = scmp.ne.s32.totalorder %s19, %s22
      %p31 = scmp.eq.s32.totalorder %s14, 1
      %p32 = por %p30, %p31
      %p33 = scmp.ne.s32.totalorder %s22, %s23
      %p34 = scmp.eq.s32.totalorder %s14, 0
      %p35 = por %p33, %p34
      %p36 = scmp.ne.s32.totalorder %s22, %s23
      %p37 = scmp.eq.s32.totalorder %s15, 1
      %p38 = por %p36, %p37
      %p40 = scmp.ne.s32.totalorder %s23, %s39
      %p41 = scmp.eq.s32.totalorder %s15, 0
      %p42 = por %p40, %p41
      %s44 = sadd.s32 %s43, 1
      %p47 = scmp.eq.s32.totalorder %s9, 1
      %p48 = scmp.ne.s32.totalorder %s43, %s45
      %p49 = scmp.eq.s32.totalorder %s9, 0
      %p50 = por %p48, %p49
      %p51 = scmp.ne.s32.totalorder %s43, %s45
      %p52 = scmp.eq.s32.totalorder %s14, 1
      %p53 = por %p51, %p52
      %p54 = scmp.ne.s32.totalorder %s45, %s46
      %p55 = scmp.eq.s32.totalorder %s14, 0
      %p56 = por %p54, %p55
      %p57 = scmp.ne.s32.totalorder %s45, %s46
      %p58 = scmp.eq.s32.totalorder %s15, 1
      %p59 = por %p57, %p58
      %p61 = scmp.ne.s32.totalorder %s46, %s60
      %p62 = scmp.eq.s32.totalorder %s15, 0
      %p63 = por %p61, %p62
      %s65 = sadd.s32 %s64, 1
      %p68 = scmp.eq.s32.totalorder %s9, 1
      %p69 = scmp.ne.s32.totalorder %s64, %s66
      %p70 = scmp.eq.s32.totalorder %s9, 0
      %p71 = por %p69, %p70
      %p72 = scmp.ne.s32.totalorder %s64, %s66
      %p73 = scmp.eq.s32.totalorder %s14, 1
      %p74 = por %p72, %p73
      %p75 = scmp.ne.s32.totalorder %s66, %s67
      %p76 = scmp.eq.s32.totalorder %s14, 0
      %p77 = por %p75, %p76
      %p78 = scmp.ne.s32.totalorder %s66, %s67
      %p79 = scmp.eq.s32.totalorder %s15, 1
      %p80 = por %p78, %p79
      %p82 = scmp.ne.s32.totalorder %s67, %s81
      %p83 = scmp.eq.s32.totalorder %s15, 0
      %p84 = por %p82, %p83
      %s85 = ssub.s32 %s9, %s16
      %p86 = scmp.eq.s32.totalorder %s85, 0
      %s88 = sadd.s32 %s87, 1
      %s89 = scalar_select %p86, %s87, %s88
      %p92 = pneg %p86
      %p93 = scmp.eq.s32.totalorder %s9, 1
      %p94 = por %p92, %p93
      %p95 = scmp.ne.s32.totalorder %s87, %s90
      %p96 = scmp.eq.s32.totalorder %s9, 0
      %p97 = por %p95, %p96
      %p98 = scmp.ne.s32.totalorder %s87, %s90
      %p99 = scmp.eq.s32.totalorder %s14, 1
      %p100 = por %p98, %p99
      %p101 = scmp.ne.s32.totalorder %s90, %s91
      %p102 = scmp.eq.s32.totalorder %s14, 0
      %p103 = por %p101, %p102
      %p104 = scmp.ne.s32.totalorder %s90, %s91
      %p105 = scmp.eq.s32.totalorder %s15, 1
      %p106 = por %p104, %p105
      %p108 = scmp.ne.s32.totalorder %s91, %s107
      %p109 = scmp.eq.s32.totalorder %s15, 0
      %p110 = por %p108, %p109
      %p111 = scmp.le.s32.totalorder 1, %s9
      %p112 = scmp.lt.s32.totalorder %s9, 3
      %p113 = pnand %p111, %p112
      %p114 = pneg %p113
      // Predicated region
      $region9: #{model_forward.3} parent=5 // pred_check
        _
      $region10: #{model_forward.3} parent=5 // pred_check_branch
        %116 = sbr.rel (%p113) target = $region12
      $region11: #{model_forward.3} parent=5 // pred_region
        %s117 = ssub.s32 %s9, 1
        // Predicated region
        $region13: #{model_forward.3} parent=11 // pred_check
          %p118 = pneg %p56
        $region14: #{model_forward.3} parent=11 // pred_check_branch
          %120 = sbr.rel (%p118) target = $region16
        $region15: #{model_forward.3} parent=11 // pred_region
          _
        $region16: #{model_forward.3} parent=11 // pred_fallthru
          _
        // Predicated region
        $region17: #{model_forward.3} parent=11 // pred_check
          %p121 = pneg %p77
        $region18: #{model_forward.3} parent=11 // pred_check_branch
          %123 = sbr.rel (%p121) target = $region20
        $region19: #{model_forward.3} parent=11 // pred_region
          _
        $region20: #{model_forward.3} parent=11 // pred_fallthru
          _
      $region12: #{model_forward.3} parent=5 // pred_fallthru
        _
      %p124 = scmp.lt.s32.totalorder %s9, 2
      // Predicated region
      $region21: #{model_forward.3} parent=5 // pred_check
        %p125 = pneg %p124
      $region22: #{model_forward.3} parent=5 // pred_check_branch
        %127 = sbr.rel (%p125) target = $region24
      $region23: #{model_forward.3} parent=5 // pred_region
        // Predicated region
        $region25: #{model_forward.3} parent=23 // pred_check
          %p128 = pneg %p29
        $region26: #{model_forward.3} parent=23 // pred_check_branch
          %130 = sbr.rel (%p128) target = $region28
        $region27: #{model_forward.3} parent=23 // pred_region
          %s131 = sand.u32 %s19, 1
          %s132 = sand.u32 %s19, 1
          %s133 = smul.addr %s132, 288
          %s134 = scalar_lea.vmem [#allocation2], %s133
          %s135 = smul.addr %s9, 4
          %s136 = scalar_lea.vmem %s0, %s135
          // Predicated region
          $region29: #{model_forward.3} parent=27 // pred_check
            _
          $region30: #{model_forward.3} parent=27 // pred_check_branch
            %138 = sbr.rel (0) target = $region32
          $region31: #{model_forward.3} parent=27 // pred_region
            // Predicated region
            $region33: #{model_forward.3} parent=31 // pred_check
              _
            $region34: #{model_forward.3} parent=31 // pred_check_branch
              %140 = sbr.rel target = $region36
            $region35: #{model_forward.3} parent=31 // pred_region
              // Predicated region
              $region48: #{model_forward.3} parent=35 // pred_check
                _
              $region49: #{model_forward.3} parent=35 // pred_check_branch
                %297 = sbr.rel (0) target = $region51
              $region50: #{model_forward.3} parent=35 // pred_region
                loop: start=0, step=1, limit=1
                $region52: #{model_forward.3} parent=50 // loop_pre_header
                  _
                $region53: #{model_forward.3} parent=50 // loop_header
                  %s299 = sphi 0, %s303
                  %p300 = scmp.ge.s32.totalorder %s299, 1
                  %s304 = sphi %s136, %s136
                  %s305 = sphi %s134, %s134
                $region54: #{model_forward.3} parent=50 // loop_header_branch
                  %302 = sbr.rel (%p300) target = $region58
                $region55: #{model_forward.3} parent=50 // loop_body
                  _
                $region56: #{model_forward.3} parent=50 // loop_footer
                  %s303 = sadd.s32 1, %s299
                $region57: #{model_forward.3} parent=50 // loop_footer_branch
                  %298 = sbr.rel target = $region53
                $region58: #{model_forward.3} parent=50 // loop_exit
                  _
                loop: start=0, step=1, limit=1
                $region59: #{model_forward.3} parent=50 // loop_pre_header
                  _
                $region60: #{model_forward.3} parent=50 // loop_header
                  %s308 = sphi 0, %s312
                  %p309 = scmp.ge.s32.totalorder %s308, 1
                  %s313 = sphi %s136, %s136
                  %s314 = sphi %s134, %s134
                $region61: #{model_forward.3} parent=50 // loop_header_branch
                  %311 = sbr.rel (%p309) target = $region65
                $region62: #{model_forward.3} parent=50 // loop_body
                  %v315 = vld [vmem:[%s313] sm:$0xf]
                  %316 = vst [vmem:[%s314] sm:$0xf] %v315
                  %v317 = vld [vmem:[%s313 + $0x8] sm:$0xf]
                  %318 = vst [vmem:[%s314 + $0x4] sm:$0xf] %v317
                  %v319 = vld [vmem:[%s313 + $0x10] sm:$0xf]
                  %320 = vst [vmem:[%s314 + $0x8] sm:$0xf] %v319
                  %v321 = vld [vmem:[%s313 + $0x18] sm:$0xf]
                  %322 = vst [vmem:[%s314 + $0xc] sm:$0xf] %v321
                  %v323 = vld [vmem:[%s313 + $0x20] sm:$0xf]
                  %324 = vst [vmem:[%s314 + $0x10] sm:$0xf] %v323
                  %v325 = vld [vmem:[%s313 + $0x28] sm:$0xf]
                  %326 = vst [vmem:[%s314 + $0x14] sm:$0xf] %v325
                  %v327 = vld [vmem:[%s313 + $0x30] sm:$0xf]
                  %328 = vst [vmem:[%s314 + $0x18] sm:$0xf] %v327
                  %v329 = vld [vmem:[%s313 + $0x38] sm:$0xf]
                  %330 = vst [vmem:[%s314 + $0x1c] sm:$0xf] %v329
                  %v331 = vld [vmem:[%s313 + $0x40] sm:$0xf]
                  %332 = vst [vmem:[%s314 + $0x20] sm:$0xf] %v331
                  %v333 = vld [vmem:[%s313 + $0x48] sm:$0xf]
                  %334 = vst [vmem:[%s314 + $0x24] sm:$0xf] %v333
                  %v335 = vld [vmem:[%s313 + $0x50] sm:$0xf]
                  %336 = vst [vmem:[%s314 + $0x28] sm:$0xf] %v335
                  %v337 = vld [vmem:[%s313 + $0x58] sm:$0xf]
                  %338 = vst [vmem:[%s314 + $0x2c] sm:$0xf] %v337
                  %v339 = vld [vmem:[%s313 + $0x60] sm:$0xf]
                  %340 = vst [vmem:[%s314 + $0x30] sm:$0xf] %v339
                  %v341 = vld [vmem:[%s313 + $0x68] sm:$0xf]
                  %342 = vst [vmem:[%s314 + $0x34] sm:$0xf] %v341
                  %v343 = vld [vmem:[%s313 + $0x70] sm:$0xf]
                  %344 = vst [vmem:[%s314 + $0x38] sm:$0xf] %v343
                  %v345 = vld [vmem:[%s313 + $0x78] sm:$0xf]
                  %346 = vst [vmem:[%s314 + $0x3c] sm:$0xf] %v345
                  %v347 = vld [vmem:[%s313 + $0x80] sm:$0xf]
                  %348 = vst [vmem:[%s314 + $0x40] sm:$0xf] %v347
                  %v349 = vld [vmem:[%s313 + $0x88] sm:$0xf]
                  %350 = vst [vmem:[%s314 + $0x44] sm:$0xf] %v349
                  %v351 = vld [vmem:[%s313 + $0x90] sm:$0xf]
                  %352 = vst [vmem:[%s314 + $0x48] sm:$0xf] %v351
                  %v353 = vld [vmem:[%s313 + $0x98] sm:$0xf]
                  %354 = vst [vmem:[%s314 + $0x4c] sm:$0xf] %v353
                  %v355 = vld [vmem:[%s313 + $0xa0] sm:$0xf]
                  %356 = vst [vmem:[%s314 + $0x50] sm:$0xf] %v355
                  %v357 = vld [vmem:[%s313 + $0xa8] sm:$0xf]
                  %358 = vst [vmem:[%s314 + $0x54] sm:$0xf] %v357
                  %v359 = vld [vmem:[%s313 + $0xb0] sm:$0xf]
                  %360 = vst [vmem:[%s314 + $0x58] sm:$0xf] %v359
                  %v361 = vld [vmem:[%s313 + $0xb8] sm:$0xf]
                  %362 = vst [vmem:[%s314 + $0x5c] sm:$0xf] %v361
                  %v363 = vld [vmem:[%s313 + $0xc0] sm:$0xf]
                  %364 = vst [vmem:[%s314 + $0x60] sm:$0xf] %v363
                  %v365 = vld [vmem:[%s313 + $0xc8] sm:$0xf]
                  %366 = vst [vmem:[%s314 + $0x64] sm:$0xf] %v365
                  %v367 = vld [vmem:[%s313 + $0xd0] sm:$0xf]
                  %368 = vst [vmem:[%s314 + $0x68] sm:$0xf] %v367
                  %v369 = vld [vmem:[%s313 + $0xd8] sm:$0xf]
                  %370 = vst [vmem:[%s314 + $0x6c] sm:$0xf] %v369
                  %v371 = vld [vmem:[%s313 + $0xe0] sm:$0xf]
                  %372 = vst [vmem:[%s314 + $0x70] sm:$0xf] %v371
                  %v373 = vld [vmem:[%s313 + $0xe8] sm:$0xf]
                  %374 = vst [vmem:[%s314 + $0x74] sm:$0xf] %v373
                  %v375 = vld [vmem:[%s313 + $0xf0] sm:$0xf]
                  %376 = vst [vmem:[%s314 + $0x78] sm:$0xf] %v375
                  %v377 = vld [vmem:[%s313 + $0xf8] sm:$0xf]
                  %378 = vst [vmem:[%s314 + $0x7c] sm:$0xf] %v377
                  %v379 = vld [vmem:[%s313 + $0x100] sm:$0xf]
                  %380 = vst [vmem:[%s314 + $0x80] sm:$0xf] %v379
                  %v381 = vld [vmem:[%s313 + $0x108] sm:$0xf]
                  %382 = vst [vmem:[%s314 + $0x84] sm:$0xf] %v381
                  %v383 = vld [vmem:[%s313 + $0x110] sm:$0xf]
                  %384 = vst [vmem:[%s314 + $0x88] sm:$0xf] %v383
                  %v385 = vld [vmem:[%s313 + $0x118] sm:$0xf]
                  %386 = vst [vmem:[%s314 + $0x8c] sm:$0xf] %v385
                  %v387 = vld [vmem:[%s313 + $0x120] sm:$0xf]
                  %388 = vst [vmem:[%s314 + $0x90] sm:$0xf] %v387
                  %v389 = vld [vmem:[%s313 + $0x128] sm:$0xf]
                  %390 = vst [vmem:[%s314 + $0x94] sm:$0xf] %v389
                  %v391 = vld [vmem:[%s313 + $0x130] sm:$0xf]
                  %392 = vst [vmem:[%s314 + $0x98] sm:$0xf] %v391
                  %v393 = vld [vmem:[%s313 + $0x138] sm:$0xf]
                  %394 = vst [vmem:[%s314 + $0x9c] sm:$0xf] %v393
                  %v395 = vld [vmem:[%s313 + $0x140] sm:$0xf]
                  %396 = vst [vmem:[%s314 + $0xa0] sm:$0xf] %v395
                  %v397 = vld [vmem:[%s313 + $0x148] sm:$0xf]
                  %398 = vst [vmem:[%s314 + $0xa4] sm:$0xf] %v397
                  %v399 = vld [vmem:[%s313 + $0x150] sm:$0xf]
                  %400 = vst [vmem:[%s314 + $0xa8] sm:$0xf] %v399
                  %v401 = vld [vmem:[%s313 + $0x158] sm:$0xf]
                  %402 = vst [vmem:[%s314 + $0xac] sm:$0xf] %v401
                  %v403 = vld [vmem:[%s313 + $0x160] sm:$0xf]
                  %404 = vst [vmem:[%s314 + $0xb0] sm:$0xf] %v403
                  %v405 = vld [vmem:[%s313 + $0x168] sm:$0xf]
                  %406 = vst [vmem:[%s314 + $0xb4] sm:$0xf] %v405
                  %v407 = vld [vmem:[%s313 + $0x170] sm:$0xf]
                  %408 = vst [vmem:[%s314 + $0xb8] sm:$0xf] %v407
                  %v409 = vld [vmem:[%s313 + $0x178] sm:$0xf]
                  %410 = vst [vmem:[%s314 + $0xbc] sm:$0xf] %v409
                  %v411 = vld [vmem:[%s313 + $0x180] sm:$0xf]
                  %412 = vst [vmem:[%s314 + $0xc0] sm:$0xf] %v411
                  %v413 = vld [vmem:[%s313 + $0x188] sm:$0xf]
                  %414 = vst [vmem:[%s314 + $0xc4] sm:$0xf] %v413
                  %v415 = vld [vmem:[%s313 + $0x190] sm:$0xf]
                  %416 = vst [vmem:[%s314 + $0xc8] sm:$0xf] %v415
                  %v417 = vld [vmem:[%s313 + $0x198] sm:$0xf]
                  %418 = vst [vmem:[%s314 + $0xcc] sm:$0xf] %v417
                  %v419 = vld [vmem:[%s313 + $0x1a0] sm:$0xf]
                  %420 = vst [vmem:[%s314 + $0xd0] sm:$0xf] %v419
                  %v421 = vld [vmem:[%s313 + $0x1a8] sm:$0xf]
                  %422 = vst [vmem:[%s314 + $0xd4] sm:$0xf] %v421
                  %v423 = vld [vmem:[%s313 + $0x1b0] sm:$0xf]
                  %424 = vst [vmem:[%s314 + $0xd8] sm:$0xf] %v423
                  %v425 = vld [vmem:[%s313 + $0x1b8] sm:$0xf]
                  %426 = vst [vmem:[%s314 + $0xdc] sm:$0xf] %v425
                  %v427 = vld [vmem:[%s313 + $0x1c0] sm:$0xf]
                  %428 = vst [vmem:[%s314 + $0xe0] sm:$0xf] %v427
                  %v429 = vld [vmem:[%s313 + $0x1c8] sm:$0xf]
                  %430 = vst [vmem:[%s314 + $0xe4] sm:$0xf] %v429
                  %v431 = vld [vmem:[%s313 + $0x1d0] sm:$0xf]
                  %432 = vst [vmem:[%s314 + $0xe8] sm:$0xf] %v431
                  %v433 = vld [vmem:[%s313 + $0x1d8] sm:$0xf]
                  %434 = vst [vmem:[%s314 + $0xec] sm:$0xf] %v433
                  %v435 = vld [vmem:[%s313 + $0x1e0] sm:$0xf]
                  %436 = vst [vmem:[%s314 + $0xf0] sm:$0xf] %v435
                  %v437 = vld [vmem:[%s313 + $0x1e8] sm:$0xf]
                  %438 = vst [vmem:[%s314 + $0xf4] sm:$0xf] %v437
                  %v439 = vld [vmem:[%s313 + $0x1f0] sm:$0xf]
                  %440 = vst [vmem:[%s314 + $0xf8] sm:$0xf] %v439
                  %v441 = vld [vmem:[%s313 + $0x1f8] sm:$0xf]
                  %442 = vst [vmem:[%s314 + $0xfc] sm:$0xf] %v441
                  %v443 = vld [vmem:[%s313 + $0x200] sm:$0xf]
                  %444 = vst [vmem:[%s314 + $0x100] sm:$0xf] %v443
                  %v445 = vld [vmem:[%s313 + $0x208] sm:$0xf]
                  %446 = vst [vmem:[%s314 + $0x104] sm:$0xf] %v445
                  %v447 = vld [vmem:[%s313 + $0x210] sm:$0xf]
                  %448 = vst [vmem:[%s314 + $0x108] sm:$0xf] %v447
                  %v449 = vld [vmem:[%s313 + $0x218] sm:$0xf]
                  %450 = vst [vmem:[%s314 + $0x10c] sm:$0xf] %v449
                  %v451 = vld [vmem:[%s313 + $0x220] sm:$0xf]
                  %452 = vst [vmem:[%s314 + $0x110] sm:$0xf] %v451
                  %v453 = vld [vmem:[%s313 + $0x228] sm:$0xf]
                  %454 = vst [vmem:[%s314 + $0x114] sm:$0xf] %v453
                  %v455 = vld [vmem:[%s313 + $0x230] sm:$0xf]
                  %456 = vst [vmem:[%s314 + $0x118] sm:$0xf] %v455
                  %v457 = vld [vmem:[%s313 + $0x238] sm:$0xf]
                  %458 = vst [vmem:[%s314 + $0x11c] sm:$0xf] %v457
                $region63: #{model_forward.3} parent=50 // loop_footer
                  %s312 = sadd.s32 1, %s308
                $region64: #{model_forward.3} parent=50 // loop_footer_branch
                  %307 = sbr.rel target = $region60
                $region65: #{model_forward.3} parent=50 // loop_exit
                  _
              $region51: #{model_forward.3} parent=35 // pred_fallthru
                _
            $region36: #{model_forward.3} parent=31 // pred_fallthru
              _
            // Predicated region
            $region37: #{model_forward.3} parent=31 // pred_check
              _
            $region38: #{model_forward.3} parent=31 // pred_check_branch
              %142 = sbr.rel (0) target = $region40
            $region39: #{model_forward.3} parent=31 // pred_region
              loop: start=0, step=1, limit=1
              $region41: #{model_forward.3} parent=39 // loop_pre_header
                _
              $region42: #{model_forward.3} parent=39 // loop_header
                %s145 = sphi 0, %s149
                %p146 = scmp.ge.s32.totalorder %s145, 1
                %s150 = sphi %s136, %s136
                %s151 = sphi %s134, %s134
              $region43: #{model_forward.3} parent=39 // loop_header_branch
                %148 = sbr.rel (%p146) target = $region47
              $region44: #{model_forward.3} parent=39 // loop_body
                %v152 = vld [vmem:[%s150] sm:$0xf]
                %153 = vst [vmem:[%s151] sm:$0xf] %v152
                %v154 = vld [vmem:[%s150 + $0x8] sm:$0xf]
                %155 = vst [vmem:[%s151 + $0x4] sm:$0xf] %v154
                %v156 = vld [vmem:[%s150 + $0x10] sm:$0xf]
                %157 = vst [vmem:[%s151 + $0x8] sm:$0xf] %v156
                %v158 = vld [vmem:[%s150 + $0x18] sm:$0xf]
                %159 = vst [vmem:[%s151 + $0xc] sm:$0xf] %v158
                %v160 = vld [vmem:[%s150 + $0x20] sm:$0xf]
                %161 = vst [vmem:[%s151 + $0x10] sm:$0xf] %v160
                %v162 = vld [vmem:[%s150 + $0x28] sm:$0xf]
                %163 = vst [vmem:[%s151 + $0x14] sm:$0xf] %v162
                %v164 = vld [vmem:[%s150 + $0x30] sm:$0xf]
                %165 = vst [vmem:[%s151 + $0x18] sm:$0xf] %v164
                %v166 = vld [vmem:[%s150 + $0x38] sm:$0xf]
                %167 = vst [vmem:[%s151 + $0x1c] sm:$0xf] %v166
                %v168 = vld [vmem:[%s150 + $0x40] sm:$0xf]
                %169 = vst [vmem:[%s151 + $0x20] sm:$0xf] %v168
                %v170 = vld [vmem:[%s150 + $0x48] sm:$0xf]
                %171 = vst [vmem:[%s151 + $0x24] sm:$0xf] %v170
                %v172 = vld [vmem:[%s150 + $0x50] sm:$0xf]
                %173 = vst [vmem:[%s151 + $0x28] sm:$0xf] %v172
                %v174 = vld [vmem:[%s150 + $0x58] sm:$0xf]
                %175 = vst [vmem:[%s151 + $0x2c] sm:$0xf] %v174
                %v176 = vld [vmem:[%s150 + $0x60] sm:$0xf]
                %177 = vst [vmem:[%s151 + $0x30] sm:$0xf] %v176
                %v178 = vld [vmem:[%s150 + $0x68] sm:$0xf]
                %179 = vst [vmem:[%s151 + $0x34] sm:$0xf] %v178
                %v180 = vld [vmem:[%s150 + $0x70] sm:$0xf]
                %181 = vst [vmem:[%s151 + $0x38] sm:$0xf] %v180
                %v182 = vld [vmem:[%s150 + $0x78] sm:$0xf]
                %183 = vst [vmem:[%s151 + $0x3c] sm:$0xf] %v182
                %v184 = vld [vmem:[%s150 + $0x80] sm:$0xf]
                %185 = vst [vmem:[%s151 + $0x40] sm:$0xf] %v184
                %v186 = vld [vmem:[%s150 + $0x88] sm:$0xf]
                %187 = vst [vmem:[%s151 + $0x44] sm:$0xf] %v186
                %v188 = vld [vmem:[%s150 + $0x90] sm:$0xf]
                %189 = vst [vmem:[%s151 + $0x48] sm:$0xf] %v188
                %v190 = vld [vmem:[%s150 + $0x98] sm:$0xf]
                %191 = vst [vmem:[%s151 + $0x4c] sm:$0xf] %v190
                %v192 = vld [vmem:[%s150 + $0xa0] sm:$0xf]
                %193 = vst [vmem:[%s151 + $0x50] sm:$0xf] %v192
                %v194 = vld [vmem:[%s150 + $0xa8] sm:$0xf]
                %195 = vst [vmem:[%s151 + $0x54] sm:$0xf] %v194
                %v196 = vld [vmem:[%s150 + $0xb0] sm:$0xf]
                %197 = vst [vmem:[%s151 + $0x58] sm:$0xf] %v196
                %v198 = vld [vmem:[%s150 + $0xb8] sm:$0xf]
                %199 = vst [vmem:[%s151 + $0x5c] sm:$0xf] %v198
                %v200 = vld [vmem:[%s150 + $0xc0] sm:$0xf]
                %201 = vst [vmem:[%s151 + $0x60] sm:$0xf] %v200
                %v202 = vld [vmem:[%s150 + $0xc8] sm:$0xf]
                %203 = vst [vmem:[%s151 + $0x64] sm:$0xf] %v202
                %v204 = vld [vmem:[%s150 + $0xd0] sm:$0xf]
                %205 = vst [vmem:[%s151 + $0x68] sm:$0xf] %v204
                %v206 = vld [vmem:[%s150 + $0xd8] sm:$0xf]
                %207 = vst [vmem:[%s151 + $0x6c] sm:$0xf] %v206
                %v208 = vld [vmem:[%s150 + $0xe0] sm:$0xf]
                %209 = vst [vmem:[%s151 + $0x70] sm:$0xf] %v208
                %v210 = vld [vmem:[%s150 + $0xe8] sm:$0xf]
                %211 = vst [vmem:[%s151 + $0x74] sm:$0xf] %v210
                %v212 = vld [vmem:[%s150 + $0xf0] sm:$0xf]
                %213 = vst [vmem:[%s151 + $0x78] sm:$0xf] %v212
                %v214 = vld [vmem:[%s150 + $0xf8] sm:$0xf]
                %215 = vst [vmem:[%s151 + $0x7c] sm:$0xf] %v214
                %v216 = vld [vmem:[%s150 + $0x100] sm:$0xf]
                %217 = vst [vmem:[%s151 + $0x80] sm:$0xf] %v216
                %v218 = vld [vmem:[%s150 + $0x108] sm:$0xf]
                %219 = vst [vmem:[%s151 + $0x84] sm:$0xf] %v218
                %v220 = vld [vmem:[%s150 + $0x110] sm:$0xf]
                %221 = vst [vmem:[%s151 + $0x88] sm:$0xf] %v220
                %v222 = vld [vmem:[%s150 + $0x118] sm:$0xf]
                %223 = vst [vmem:[%s151 + $0x8c] sm:$0xf] %v222
                %v224 = vld [vmem:[%s150 + $0x120] sm:$0xf]
                %225 = vst [vmem:[%s151 + $0x90] sm:$0xf] %v224
                %v226 = vld [vmem:[%s150 + $0x128] sm:$0xf]
                %227 = vst [vmem:[%s151 + $0x94] sm:$0xf] %v226
                %v228 = vld [vmem:[%s150 + $0x130] sm:$0xf]
                %229 = vst [vmem:[%s151 + $0x98] sm:$0xf] %v228
                %v230 = vld [vmem:[%s150 + $0x138] sm:$0xf]
                %231 = vst [vmem:[%s151 + $0x9c] sm:$0xf] %v230
                %v232 = vld [vmem:[%s150 + $0x140] sm:$0xf]
                %233 = vst [vmem:[%s151 + $0xa0] sm:$0xf] %v232
                %v234 = vld [vmem:[%s150 + $0x148] sm:$0xf]
                %235 = vst [vmem:[%s151 + $0xa4] sm:$0xf] %v234
                %v236 = vld [vmem:[%s150 + $0x150] sm:$0xf]
                %237 = vst [vmem:[%s151 + $0xa8] sm:$0xf] %v236
                %v238 = vld [vmem:[%s150 + $0x158] sm:$0xf]
                %239 = vst [vmem:[%s151 + $0xac] sm:$0xf] %v238
                %v240 = vld [vmem:[%s150 + $0x160] sm:$0xf]
                %241 = vst [vmem:[%s151 + $0xb0] sm:$0xf] %v240
                %v242 = vld [vmem:[%s150 + $0x168] sm:$0xf]
                %243 = vst [vmem:[%s151 + $0xb4] sm:$0xf] %v242
                %v244 = vld [vmem:[%s150 + $0x170] sm:$0xf]
                %245 = vst [vmem:[%s151 + $0xb8] sm:$0xf] %v244
                %v246 = vld [vmem:[%s150 + $0x178] sm:$0xf]
                %247 = vst [vmem:[%s151 + $0xbc] sm:$0xf] %v246
                %v248 = vld [vmem:[%s150 + $0x180] sm:$0xf]
                %249 = vst [vmem:[%s151 + $0xc0] sm:$0xf] %v248
                %v250 = vld [vmem:[%s150 + $0x188] sm:$0xf]
                %251 = vst [vmem:[%s151 + $0xc4] sm:$0xf] %v250
                %v252 = vld [vmem:[%s150 + $0x190] sm:$0xf]
                %253 = vst [vmem:[%s151 + $0xc8] sm:$0xf] %v252
                %v254 = vld [vmem:[%s150 + $0x198] sm:$0xf]
                %255 = vst [vmem:[%s151 + $0xcc] sm:$0xf] %v254
                %v256 = vld [vmem:[%s150 + $0x1a0] sm:$0xf]
                %257 = vst [vmem:[%s151 + $0xd0] sm:$0xf] %v256
                %v258 = vld [vmem:[%s150 + $0x1a8] sm:$0xf]
                %259 = vst [vmem:[%s151 + $0xd4] sm:$0xf] %v258
                %v260 = vld [vmem:[%s150 + $0x1b0] sm:$0xf]
                %261 = vst [vmem:[%s151 + $0xd8] sm:$0xf] %v260
                %v262 = vld [vmem:[%s150 + $0x1b8] sm:$0xf]
                %263 = vst [vmem:[%s151 + $0xdc] sm:$0xf] %v262
                %v264 = vld [vmem:[%s150 + $0x1c0] sm:$0xf]
                %265 = vst [vmem:[%s151 + $0xe0] sm:$0xf] %v264
                %v266 = vld [vmem:[%s150 + $0x1c8] sm:$0xf]
                %267 = vst [vmem:[%s151 + $0xe4] sm:$0xf] %v266
                %v268 = vld [vmem:[%s150 + $0x1d0] sm:$0xf]
                %269 = vst [vmem:[%s151 + $0xe8] sm:$0xf] %v268
                %v270 = vld [vmem:[%s150 + $0x1d8] sm:$0xf]
                %271 = vst [vmem:[%s151 + $0xec] sm:$0xf] %v270
                %v272 = vld [vmem:[%s150 + $0x1e0] sm:$0xf]
                %273 = vst [vmem:[%s151 + $0xf0] sm:$0xf] %v272
                %v274 = vld [vmem:[%s150 + $0x1e8] sm:$0xf]
                %275 = vst [vmem:[%s151 + $0xf4] sm:$0xf] %v274
                %v276 = vld [vmem:[%s150 + $0x1f0] sm:$0xf]
                %277 = vst [vmem:[%s151 + $0xf8] sm:$0xf] %v276
                %v278 = vld [vmem:[%s150 + $0x1f8] sm:$0xf]
                %279 = vst [vmem:[%s151 + $0xfc] sm:$0xf] %v278
                %v280 = vld [vmem:[%s150 + $0x200] sm:$0xf]
                %281 = vst [vmem:[%s151 + $0x100] sm:$0xf] %v280
                %v282 = vld [vmem:[%s150 + $0x208] sm:$0xf]
                %283 = vst [vmem:[%s151 + $0x104] sm:$0xf] %v282
                %v284 = vld [vmem:[%s150 + $0x210] sm:$0xf]
                %285 = vst [vmem:[%s151 + $0x108] sm:$0xf] %v284
                %v286 = vld [vmem:[%s150 + $0x218] sm:$0xf]
                %287 = vst [vmem:[%s151 + $0x10c] sm:$0xf] %v286
                %v288 = vld [vmem:[%s150 + $0x220] sm:$0xf]
                %289 = vst [vmem:[%s151 + $0x110] sm:$0xf] %v288
                %v290 = vld [vmem:[%s150 + $0x228] sm:$0xf]
                %291 = vst [vmem:[%s151 + $0x114] sm:$0xf] %v290
                %v292 = vld [vmem:[%s150 + $0x230] sm:$0xf]
                %293 = vst [vmem:[%s151 + $0x118] sm:$0xf] %v292
                %v294 = vld [vmem:[%s150 + $0x238] sm:$0xf]
                %295 = vst [vmem:[%s151 + $0x11c] sm:$0xf] %v294
              $region45: #{model_forward.3} parent=39 // loop_footer
                %s149 = sadd.s32 1, %s145
              $region46: #{model_forward.3} parent=39 // loop_footer_branch
                %144 = sbr.rel target = $region42
              $region47: #{model_forward.3} parent=39 // loop_exit
                _
            $region40: #{model_forward.3} parent=31 // pred_fallthru
              _
          $region32: #{model_forward.3} parent=27 // pred_fallthru
            _
          %459 = vnop
        $region28: #{model_forward.3} parent=23 // pred_fallthru
          _
      $region24: #{model_forward.3} parent=5 // pred_fallthru
        _
      %p460 = scmp.le.s32.totalorder 1, %s9
      %p461 = scmp.lt.s32.totalorder %s9, 3
      %p462 = pnand %p460, %p461
      %p463 = pneg %p462
      // Predicated region
      $region66: #{model_forward.3} parent=5 // pred_check
        _
      $region67: #{model_forward.3} parent=5 // pred_check_branch
        %465 = sbr.rel (%p462) target = $region69
      $region68: #{model_forward.3} parent=5 // pred_region
        %s466 = ssub.s32 %s9, 1
        %s467 = sand.u32 %s22, 1
        %s468 = sand.u32 %s22, 1
        %s469 = smul.addr %s468, 288
        %s470 = scalar_lea.vmem [#allocation2], %s469
        // Predicated region
        $region70: #{model_forward.3} parent=68 // pred_check
          %p471 = pneg %p35
        $region71: #{model_forward.3} parent=68 // pred_check_branch
          %473 = sbr.rel (%p471) target = $region73
        $region72: #{model_forward.3} parent=68 // pred_region
          _
        $region73: #{model_forward.3} parent=68 // pred_fallthru
          _
        %s474 = sand.u32 %s22, 1
        %s475 = sand.u32 %s22, 1
        %s476 = smul.addr %s475, 288
        %s477 = scalar_lea.vmem [#allocation2], %s476
        %p478 = pneg %p35
        %p479 = pneg %p32
        %p480 = pneg %p56
        %p481 = pneg %p53
        %p482 = pneg %p77
        %p483 = pneg %p74
        %p484 = pneg %p103
        %p485 = pneg %p100
        %s486 = sand.u32 %s90, 1
        %s487 = sand.u32 %s90, 1
        %s488 = smul.addr %s487, 16
        %s489 = scalar_lea.vmem [#allocation3], %s488
        %v491 = vld [vmem:[%s1] sm:$0xff]
        %v492 = vld [vmem:[%s1 + $0x8] sm:$0xff]
        %v493 = vld [vmem:[%s1 + $0x10] sm:$0xf]
        %v494 = vld [vmem:[%s1 + $0x14] sm:$0xff]
        %v495 = vld [vmem:[%s1 + $0x1c] sm:$0xff]
        %v496 = vld [vmem:[%s1 + $0x24] sm:$0xf]
        %v497 = vld [vmem:[%s470] sm:$0xf]
        %v498 = vld [vmem:[%s470 + $0x4] sm:$0xf]
        %v499 = vld [vmem:[%s470 + $0x8] sm:$0xf]
        %v500 = vld [vmem:[%s470 + $0xc] sm:$0xf]
        %v501 = vld [vmem:[%s470 + $0x10] sm:$0xf]
        %v502 = vld [vmem:[%s470 + $0x14] sm:$0xf]
        %v503 = vld [vmem:[%s470 + $0x18] sm:$0xf]
        %v504 = vld [vmem:[%s470 + $0x1c] sm:$0xf]
        %v505 = vld [vmem:[%s470 + $0x20] sm:$0xf]
        %v506 = vld [vmem:[%s470 + $0x24] sm:$0xf]
        %v507 = vld [vmem:[%s470 + $0x28] sm:$0xf]
        %v508 = vld [vmem:[%s470 + $0x2c] sm:$0xf]
        %v509 = vld [vmem:[%s470 + $0x30] sm:$0xf]
        %v510 = vld [vmem:[%s470 + $0x34] sm:$0xf]
        %v511 = vld [vmem:[%s470 + $0x38] sm:$0xf]
        %v512 = vld [vmem:[%s470 + $0x3c] sm:$0xf]
        %v513 = vld [vmem:[%s470 + $0x40] sm:$0xf]
        %v514 = vld [vmem:[%s470 + $0x44] sm:$0xf]
        %v515 = vld [vmem:[%s470 + $0x48] sm:$0xf]
        %v516 = vld [vmem:[%s470 + $0x4c] sm:$0xf]
        %v517 = vld [vmem:[%s470 + $0x50] sm:$0xf]
        %v518 = vld [vmem:[%s470 + $0x54] sm:$0xf]
        %v519 = vld [vmem:[%s470 + $0x58] sm:$0xf]
        %v520 = vld [vmem:[%s470 + $0x5c] sm:$0xf]
        %v521 = vld [vmem:[%s470 + $0x60] sm:$0xf]
        %v522 = vld [vmem:[%s470 + $0x64] sm:$0xf]
        %v523 = vld [vmem:[%s470 + $0x68] sm:$0xf]
        %v524 = vld [vmem:[%s470 + $0x6c] sm:$0xf]
        %v525 = vld [vmem:[%s470 + $0x70] sm:$0xf]
        %v526 = vld [vmem:[%s470 + $0x74] sm:$0xf]
        %v527 = vld [vmem:[%s470 + $0x78] sm:$0xf]
        %v528 = vld [vmem:[%s470 + $0x7c] sm:$0xf]
        %v529 = vld [vmem:[%s470 + $0x80] sm:$0xf]
        %v530 = vld [vmem:[%s470 + $0x84] sm:$0xf]
        %v531 = vld [vmem:[%s470 + $0x88] sm:$0xf]
        %v532 = vld [vmem:[%s470 + $0x8c] sm:$0xf]
        %v533 = vld [vmem:[%s470 + $0x90] sm:$0xf]
        %v534 = vld [vmem:[%s470 + $0x94] sm:$0xf]
        %v535 = vld [vmem:[%s470 + $0x98] sm:$0xf]
        %v536 = vld [vmem:[%s470 + $0x9c] sm:$0xf]
        %v537 = vld [vmem:[%s470 + $0xa0] sm:$0xf]
        %v538 = vld [vmem:[%s470 + $0xa4] sm:$0xf]
        %v539 = vld [vmem:[%s470 + $0xa8] sm:$0xf]
        %v540 = vld [vmem:[%s470 + $0xac] sm:$0xf]
        %v541 = vld [vmem:[%s470 + $0xb0] sm:$0xf]
        %v542 = vld [vmem:[%s470 + $0xb4] sm:$0xf]
        %v543 = vld [vmem:[%s470 + $0xb8] sm:$0xf]
        %v544 = vld [vmem:[%s470 + $0xbc] sm:$0xf]
        %v545 = vld [vmem:[%s470 + $0xc0] sm:$0xf]
        %v546 = vld [vmem:[%s470 + $0xc4] sm:$0xf]
        %v547 = vld [vmem:[%s470 + $0xc8] sm:$0xf]
        %v548 = vld [vmem:[%s470 + $0xcc] sm:$0xf]
        %v549 = vld [vmem:[%s470 + $0xd0] sm:$0xf]
        %v550 = vld [vmem:[%s470 + $0xd4] sm:$0xf]
        %v551 = vld [vmem:[%s470 + $0xd8] sm:$0xf]
        %v552 = vld [vmem:[%s470 + $0xdc] sm:$0xf]
        %v553 = vld [vmem:[%s470 + $0xe0] sm:$0xf]
        %v554 = vld [vmem:[%s470 + $0xe4] sm:$0xf]
        %v555 = vld [vmem:[%s470 + $0xe8] sm:$0xf]
        %v556 = vld [vmem:[%s470 + $0xec] sm:$0xf]
        %v557 = vld [vmem:[%s470 + $0xf0] sm:$0xf]
        %v558 = vld [vmem:[%s470 + $0xf4] sm:$0xf]
        %v559 = vld [vmem:[%s470 + $0xf8] sm:$0xf]
        %v560 = vld [vmem:[%s470 + $0xfc] sm:$0xf]
        %v561 = vld [vmem:[%s470 + $0x100] sm:$0xf]
        %v562 = vld [vmem:[%s470 + $0x104] sm:$0xf]
        %v563 = vld [vmem:[%s470 + $0x108] sm:$0xf]
        %v564 = vld [vmem:[%s470 + $0x10c] sm:$0xf]
        %v565 = vld [vmem:[%s470 + $0x110] sm:$0xf]
        %v566 = vld [vmem:[%s470 + $0x114] sm:$0xf]
        %v567 = vld [vmem:[%s470 + $0x118] sm:$0xf]
        %v568 = vld [vmem:[%s470 + $0x11c] sm:$0xf]
        %v569 = vld [vmem:[%s2] sm:$0xff]
        %v570 = vld [vmem:[%s2 + $0x8] sm:$0xff]
        %572 = vset.pattern.permute.xlu0 0
        %573 = vperm.xlu0 %572, %v569
        %v574 = vpop.permute.xlu0 %573
        %577 = vset.pattern.permute.xlu0 0
        %578 = vperm.xlu0 %577, %v570
        %v579 = vpop.permute.xlu0 %578
        %v587 = vunpack.c.l.b16 %v491
        %v588 = vunpack.c.h.b16 %v491
        %v589 = vunpack.c.l.b16 %v492
        %v590 = vunpack.c.h.b16 %v492
        %v591 = vunpack.c.l.b16 %v493
        %v592 = vunpack.c.l.b16 %v494
        %v593 = vunpack.c.h.b16 %v494
        %v594 = vunpack.c.l.b16 %v495
        %v595 = vunpack.c.h.b16 %v495
        %v596 = vunpack.c.l.b16 %v496
        %v597 = vpack.c.b16 %v592, %v587
        %v598 = vpack.c.b16 %v593, %v588
        %v599 = vpack.c.b16 %v594, %v589
        %v600 = vpack.c.b16 %v595, %v590
        %v601 = vpack.c.b16 %v596, %v591
        %v678 = vunpack.c.l.b16 %v497
        %v679 = vunpack.c.l.b16 %v498
        %v680 = vunpack.c.l.b16 %v499
        %v681 = vunpack.c.l.b16 %v500
        %v682 = vunpack.c.l.b16 %v501
        %v683 = vunpack.c.l.b16 %v502
        %v684 = vunpack.c.l.b16 %v503
        %v685 = vunpack.c.l.b16 %v504
        %v686 = vunpack.c.l.b16 %v505
        %v687 = vunpack.c.l.b16 %v506
        %v688 = vunpack.c.l.b16 %v507
        %v689 = vunpack.c.l.b16 %v508
        %v690 = vunpack.c.l.b16 %v509
        %v691 = vunpack.c.l.b16 %v510
        %v692 = vunpack.c.l.b16 %v511
        %v693 = vunpack.c.l.b16 %v512
        %v694 = vunpack.c.l.b16 %v513
        %v695 = vunpack.c.l.b16 %v514
        %v696 = vunpack.c.l.b16 %v515
        %v697 = vunpack.c.l.b16 %v516
        %v698 = vunpack.c.l.b16 %v517
        %v699 = vunpack.c.l.b16 %v518
        %v700 = vunpack.c.l.b16 %v519
        %v701 = vunpack.c.l.b16 %v520
        %v702 = vunpack.c.l.b16 %v521
        %v703 = vunpack.c.l.b16 %v522
        %v704 = vunpack.c.l.b16 %v523
        %v705 = vunpack.c.l.b16 %v524
        %v706 = vunpack.c.l.b16 %v525
        %v707 = vunpack.c.l.b16 %v526
        %v708 = vunpack.c.l.b16 %v527
        %v709 = vunpack.c.l.b16 %v528
        %v710 = vunpack.c.l.b16 %v529
        %v711 = vunpack.c.l.b16 %v530
        %v712 = vunpack.c.l.b16 %v531
        %v713 = vunpack.c.l.b16 %v532
        %v714 = vunpack.c.l.b16 %v533
        %v715 = vunpack.c.l.b16 %v534
        %v716 = vunpack.c.l.b16 %v535
        %v717 = vunpack.c.l.b16 %v536
        %v718 = vunpack.c.l.b16 %v537
        %v719 = vunpack.c.l.b16 %v538
        %v720 = vunpack.c.l.b16 %v539
        %v721 = vunpack.c.l.b16 %v540
        %v722 = vunpack.c.l.b16 %v541
        %v723 = vunpack.c.l.b16 %v542
        %v724 = vunpack.c.l.b16 %v543
        %v725 = vunpack.c.l.b16 %v544
        %v726 = vunpack.c.l.b16 %v545
        %v727 = vunpack.c.l.b16 %v546
        %v728 = vunpack.c.l.b16 %v547
        %v729 = vunpack.c.l.b16 %v548
        %v730 = vunpack.c.l.b16 %v549
        %v731 = vunpack.c.l.b16 %v550
        %v732 = vunpack.c.l.b16 %v551
        %v733 = vunpack.c.l.b16 %v552
        %v734 = vunpack.c.l.b16 %v553
        %v735 = vunpack.c.l.b16 %v554
        %v736 = vunpack.c.l.b16 %v555
        %v737 = vunpack.c.l.b16 %v556
        %v738 = vunpack.c.l.b16 %v557
        %v739 = vunpack.c.l.b16 %v558
        %v740 = vunpack.c.l.b16 %v559
        %v741 = vunpack.c.l.b16 %v560
        %v742 = vunpack.c.l.b16 %v561
        %v743 = vunpack.c.l.b16 %v562
        %v744 = vunpack.c.l.b16 %v563
        %v745 = vunpack.c.l.b16 %v564
        %v746 = vunpack.c.l.b16 %v565
        %v747 = vunpack.c.l.b16 %v566
        %v748 = vunpack.c.l.b16 %v567
        %v749 = vunpack.c.l.b16 %v568
        %v750 = vpack.c.b16 %v679, %v678
        %v751 = vpack.c.b16 %v681, %v680
        %v752 = vpack.c.b16 %v683, %v682
        %v753 = vpack.c.b16 %v685, %v684
        %v754 = vpack.c.b16 %v687, %v686
        %v755 = vpack.c.b16 %v689, %v688
        %v756 = vpack.c.b16 %v691, %v690
        %v757 = vpack.c.b16 %v693, %v692
        %v758 = vpack.c.b16 %v695, %v694
        %v759 = vpack.c.b16 %v697, %v696
        %v760 = vpack.c.b16 %v699, %v698
        %v761 = vpack.c.b16 %v701, %v700
        %v762 = vpack.c.b16 %v703, %v702
        %v763 = vpack.c.b16 %v705, %v704
        %v764 = vpack.c.b16 %v707, %v706
        %v765 = vpack.c.b16 %v709, %v708
        %v766 = vpack.c.b16 %v711, %v710
        %v767 = vpack.c.b16 %v713, %v712
        %v768 = vpack.c.b16 %v715, %v714
        %v769 = vpack.c.b16 %v717, %v716
        %v770 = vpack.c.b16 %v719, %v718
        %v771 = vpack.c.b16 %v721, %v720
        %v772 = vpack.c.b16 %v723, %v722
        %v773 = vpack.c.b16 %v725, %v724
        %v774 = vpack.c.b16 %v727, %v726
        %v775 = vpack.c.b16 %v729, %v728
        %v776 = vpack.c.b16 %v731, %v730
        %v777 = vpack.c.b16 %v733, %v732
        %v778 = vpack.c.b16 %v735, %v734
        %v779 = vpack.c.b16 %v737, %v736
        %v780 = vpack.c.b16 %v739, %v738
        %v781 = vpack.c.b16 %v741, %v740
        %v782 = vpack.c.b16 %v743, %v742
        %v783 = vpack.c.b16 %v745, %v744
        %v784 = vpack.c.b16 %v747, %v746
        %v785 = vpack.c.b16 %v749, %v748
        %vm822 = vcmask 523264
        %v824 = vsel %vm822, %v601, 0
        %826 = vmatprep.subr.bf16.mxu0 0
        %827 = vmatpush1.bf16.msra.mxu0 %v750
        %828 = vmatprep.subr.bf16.mxu0 0
        %829 = vmatpush1.bf16.msra.mxu0 %v751
        %830 = vmatprep.subr.bf16.mxu0 0
        %831 = vmatpush1.bf16.msra.mxu0 %v752
        %832 = vmatprep.subr.bf16.mxu0 0
        %833 = vmatpush1.bf16.msra.mxu0 %v753
        %834 = vmatprep.subr.bf16.mxu0 0
        %835 = vmatpush1.bf16.msra.mxu0 %v754
        %836 = vmatprep.subr.bf16.mxu0 0
        %837 = vmatpush1.bf16.msra.mxu0 %v755
        %838 = vmatprep.subr.bf16.mxu0 0
        %839 = vmatpush1.bf16.msra.mxu0 %v756
        %840 = vmatprep.subr.bf16.mxu0 0
        %841 = vmatpush1.bf16.msra.mxu0 %v757
        %842 = vmatprep.subr.bf16.mxu0 0
        %843 = vmatpush1.bf16.msra.mxu0 %v758
        %844 = vmatprep.subr.bf16.mxu0 0
        %845 = vmatpush1.bf16.msra.mxu0 %v759
        %846 = vmatprep.subr.bf16.mxu0 0
        %847 = vmatpush1.bf16.msra.mxu0 %v760
        %848 = vmatprep.subr.bf16.mxu0 0
        %849 = vmatpush1.bf16.msra.mxu0 %v761
        %850 = vmatprep.subr.bf16.mxu0 0
        %851 = vmatpush1.bf16.msra.mxu0 %v762
        %852 = vmatprep.subr.bf16.mxu0 0
        %853 = vmatpush1.bf16.msra.mxu0 %v763
        %854 = vmatprep.subr.bf16.mxu0 0
        %855 = vmatpush1.bf16.msra.mxu0 %v764
        %856 = vmatprep.subr.bf16.mxu0 0
        %857 = vmatpush1.bf16.msra.mxu0 %v765
        %858 = vmatprep.mubr.bf16.mxu0 %v598
        %859 = vmatmul.mubr.bf16.gmra.mrb[0].mxu0 %v597
        %v860 = vpop.f32.mrb[0].mxu0
        %v861 = vadd.f32 %v574, %v860
        %v862 = vpop.f32.mrb[0].mxu0
        %v863 = vpop.f32.mrb[0].mxu0
        %v864 = vadd.f32 %v579, %v863
        %v865 = vpop.f32.mrb[0].mxu0
        %866 = vdwg.mxu0
        %867 = vmatprep.subr.bf16.mxu0 0
        %868 = vmatpush1.bf16.msra.mxu0 %v766
        %869 = vmatprep.subr.bf16.mxu0 0
        %870 = vmatpush1.bf16.msra.mxu0 %v767
        %871 = vmatprep.subr.bf16.mxu0 0
        %872 = vmatpush1.bf16.msra.mxu0 %v768
        %873 = vmatprep.subr.bf16.mxu0 0
        %874 = vmatpush1.bf16.msra.mxu0 %v769
        %875 = vmatprep.subr.bf16.mxu0 0
        %876 = vmatpush1.bf16.msra.mxu0 %v770
        %877 = vmatprep.subr.bf16.mxu0 0
        %878 = vmatpush1.bf16.msra.mxu0 %v771
        %879 = vmatprep.subr.bf16.mxu0 0
        %880 = vmatpush1.bf16.msra.mxu0 %v772
        %881 = vmatprep.subr.bf16.mxu0 0
        %882 = vmatpush1.bf16.msra.mxu0 %v773
        %883 = vmatprep.subr.bf16.mxu0 0
        %884 = vmatpush1.bf16.msra.mxu0 %v774
        %885 = vmatprep.subr.bf16.mxu0 0
        %886 = vmatpush1.bf16.msra.mxu0 %v775
        %887 = vmatprep.subr.bf16.mxu0 0
        %888 = vmatpush1.bf16.msra.mxu0 %v776
        %889 = vmatprep.subr.bf16.mxu0 0
        %890 = vmatpush1.bf16.msra.mxu0 %v777
        %891 = vmatprep.subr.bf16.mxu0 0
        %892 = vmatpush1.bf16.msra.mxu0 %v778
        %893 = vmatprep.subr.bf16.mxu0 0
        %894 = vmatpush1.bf16.msra.mxu0 %v779
        %895 = vmatprep.subr.bf16.mxu0 0
        %896 = vmatpush1.bf16.msra.mxu0 %v780
        %897 = vmatprep.subr.bf16.mxu0 0
        %898 = vmatpush1.bf16.msra.mxu0 %v781
        %899 = vmatprep.mubr.bf16.mxu0 %v600
        %900 = vmatmul.mubr.bf16.gmra.mrb[0].mxu0 %v599
        %v901 = vpop.f32.mrb[0].mxu0
        %v902 = vadd.f32 %v861, %v901
        %v903 = vpop.f32.mrb[0].mxu0
        %v904 = vpop.f32.mrb[0].mxu0
        %v905 = vadd.f32 %v864, %v904
        %v906 = vpop.f32.mrb[0].mxu0
        %907 = vdwg.mxu0
        %908 = vmatprep.subr.bf16.mxu0 0
        %909 = vmatpush1.bf16.msra.mxu0 %v782
        %910 = vmatprep.subr.bf16.mxu0 0
        %911 = vmatpush1.bf16.msra.mxu0 %v783
        %912 = vmatprep.subr.bf16.mxu0 0
        %913 = vmatpush1.bf16.msra.mxu0 %v784
        %914 = vmatprep.subr.bf16.mxu0 0
        %915 = vmatpush1.bf16.msra.mxu0 %v785
        %916 = vmatprep.subr.bf16.mxu0 0
        %917 = vmatpush1.bf16.msra.mxu0 0
        %918 = vmatprep.subr.bf16.mxu0 0
        %919 = vmatpush1.bf16.msra.mxu0 0
        %920 = vmatprep.subr.bf16.mxu0 0
        %921 = vmatpush1.bf16.msra.mxu0 0
        %922 = vmatprep.subr.bf16.mxu0 0
        %923 = vmatpush1.bf16.msra.mxu0 0
        %924 = vmatprep.subr.bf16.mxu0 0
        %925 = vmatpush1.bf16.msra.mxu0 0
        %926 = vmatprep.subr.bf16.mxu0 0
        %927 = vmatpush1.bf16.msra.mxu0 0
        %928 = vmatprep.subr.bf16.mxu0 0
        %929 = vmatpush1.bf16.msra.mxu0 0
        %930 = vmatprep.subr.bf16.mxu0 0
        %931 = vmatpush1.bf16.msra.mxu0 0
        %932 = vmatprep.subr.bf16.mxu0 0
        %933 = vmatpush1.bf16.msra.mxu0 0
        %934 = vmatprep.subr.bf16.mxu0 0
        %935 = vmatpush1.bf16.msra.mxu0 0
        %936 = vmatprep.subr.bf16.mxu0 0
        %937 = vmatpush1.bf16.msra.mxu0 0
        %938 = vmatprep.subr.bf16.mxu0 0
        %939 = vmatpush1.bf16.msra.mxu0 0
        %940 = vmatprep.mubr.bf16.mxu0 0
        %941 = vmatmul.mubr.bf16.gmra.mrb[0].mxu0 %v824
        %v942 = vpop.f32.mrb[0].mxu0
        %v943 = vadd.f32 %v902, %v942
        %v944 = vpop.f32.mrb[0].mxu0
        %v945 = vpop.f32.mrb[0].mxu0
        %v946 = vadd.f32 %v905, %v945
        %v947 = vpop.f32.mrb[0].mxu0
        %948 = vdwg.mxu0
        %v949 = vmax.f32 %v943, %v946
        %v950 = vrot.slane %v949, 4
        %v951 = vmax.f32 %v949, %v950
        %v952 = vrot.slane %v951, 2
        %v953 = vmax.f32 %v951, %v952
        %v954 = vrot.slane %v953, 1
        %v955 = vmax.f32 %v953, %v954
        %v956 = vsub.f32 %v943, %v955
        %v957 = vsub.f32 %v946, %v955
        %v958 = vmul.f32 %v956, 1.442695
        %v959 = vpow.pop %v958
        %v960 = vmul.f32 %v957, 1.442695
        %v961 = vpow.pop %v960
        %v962 = vadd.f32 %v959, %v961
        %v963 = vrot.slane %v962, 4
        %v964 = vadd.f32 %v962, %v963
        %v965 = vrot.slane %v964, 2
        %v966 = vadd.f32 %v964, %v965
        %v967 = vrot.slane %v966, 1
        %v968 = vadd.f32 %v966, %v967
        %v969 = vrcp.pop %v968
        %v970 = vmul.f32 %v959, %v969
        %v971 = vmul.f32 %v961, %v969
        %972 = vst [vmem:[%s489] sm:$0xff] %v970
        %973 = vst [vmem:[%s489 + $0x8] sm:$0xff] %v971
        %s974 = sand.u32 %s90, 1
        %s975 = sand.u32 %s90, 1
        %s976 = smul.addr %s975, 16
        %s977 = scalar_lea.vmem [#allocation3], %s976
        // Predicated region
        $region74: #{model_forward.3} parent=68 // pred_check
          %p978 = pneg %p100
        $region75: #{model_forward.3} parent=68 // pred_check_branch
          %980 = sbr.rel (%p978) target = $region77
        $region76: #{model_forward.3} parent=68 // pred_region
          %s981 = smul.addr %s14, 8
          %s982 = scalar_lea.vmem %s3, %s981
          // Predicated region
          $region78: #{model_forward.3} parent=76 // pred_check
            _
          $region79: #{model_forward.3} parent=76 // pred_check_branch
            %984 = sbr.rel (0) target = $region81
          $region80: #{model_forward.3} parent=76 // pred_region
            // Predicated region
            $region82: #{model_forward.3} parent=80 // pred_check
              _
            $region83: #{model_forward.3} parent=80 // pred_check_branch
              %986 = sbr.rel (0) target = $region85
            $region84: #{model_forward.3} parent=80 // pred_region
              // Predicated region
              $region97: #{model_forward.3} parent=84 // pred_check
                _
              $region98: #{model_forward.3} parent=84 // pred_check_branch
                %1003 = sbr.rel (0) target = $region100
              $region99: #{model_forward.3} parent=84 // pred_region
                loop: start=0, step=1, limit=1
                $region101: #{model_forward.3} parent=99 // loop_pre_header
                  _
                $region102: #{model_forward.3} parent=99 // loop_header
                  %s1005 = sphi 0, %s1009
                  %p1006 = scmp.ge.s32.totalorder %s1005, 1
                  %s1010 = sphi %s977, %s977
                  %s1011 = sphi %s982, %s982
                $region103: #{model_forward.3} parent=99 // loop_header_branch
                  %1008 = sbr.rel (%p1006) target = $region107
                $region104: #{model_forward.3} parent=99 // loop_body
                  %v1012 = vld [vmem:[%s1010] sm:$0xff]
                  %1013 = vst [vmem:[%s1011] sm:$0xff] %v1012
                  %v1014 = vld [vmem:[%s1010 + $0x8] sm:$0xff]
                  %1015 = vst [vmem:[%s1011 + $0x10] sm:$0xff] %v1014
                $region105: #{model_forward.3} parent=99 // loop_footer
                  %s1009 = sadd.s32 1, %s1005
                $region106: #{model_forward.3} parent=99 // loop_footer_branch
                  %1004 = sbr.rel target = $region102
                $region107: #{model_forward.3} parent=99 // loop_exit
                  _
              $region100: #{model_forward.3} parent=84 // pred_fallthru
                _
              // Predicated region
              $region108: #{model_forward.3} parent=84 // pred_check
                _
              $region109: #{model_forward.3} parent=84 // pred_check_branch
                %1017 = sbr.rel target = $region111
              $region110: #{model_forward.3} parent=84 // pred_region
                _
              $region111: #{model_forward.3} parent=84 // pred_fallthru
                _
            $region85: #{model_forward.3} parent=80 // pred_fallthru
              _
            // Predicated region
            $region86: #{model_forward.3} parent=80 // pred_check
              _
            $region87: #{model_forward.3} parent=80 // pred_check_branch
              %988 = sbr.rel target = $region89
            $region88: #{model_forward.3} parent=80 // pred_region
              loop: start=0, step=1, limit=1
              $region90: #{model_forward.3} parent=88 // loop_pre_header
                _
              $region91: #{model_forward.3} parent=88 // loop_header
                %s991 = sphi 0, %s995
                %p992 = scmp.ge.s32.totalorder %s991, 1
                %s996 = sphi %s977, %s977
                %s997 = sphi %s982, %s982
              $region92: #{model_forward.3} parent=88 // loop_header_branch
                %994 = sbr.rel (%p992) target = $region96
              $region93: #{model_forward.3} parent=88 // loop_body
                %v998 = vld [vmem:[%s996] sm:$0xff]
                %999 = vst [vmem:[%s997] sm:$0xff] %v998
                %v1000 = vld [vmem:[%s996 + $0x8] sm:$0xff]
                %1001 = vst [vmem:[%s997 + $0x10] sm:$0xff] %v1000
              $region94: #{model_forward.3} parent=88 // loop_footer
                %s995 = sadd.s32 1, %s991
              $region95: #{model_forward.3} parent=88 // loop_footer_branch
                %990 = sbr.rel target = $region91
              $region96: #{model_forward.3} parent=88 // loop_exit
                _
            $region89: #{model_forward.3} parent=80 // pred_fallthru
              _
          $region81: #{model_forward.3} parent=76 // pred_fallthru
            _
          %1018 = vnop
        $region77: #{model_forward.3} parent=68 // pred_fallthru
          _
      $region69: #{model_forward.3} parent=5 // pred_fallthru
        _
      %p1019 = scmp.le.s32.totalorder 2, %s9
      // Predicated region
      $region112: #{model_forward.3} parent=5 // pred_check
        %p1020 = pneg %p1019
      $region113: #{model_forward.3} parent=5 // pred_check_branch
        %1022 = sbr.rel (%p1020) target = $region115
      $region114: #{model_forward.3} parent=5 // pred_region
        %s1023 = ssub.s32 %s9, 2
        // Predicated region
        $region116: #{model_forward.3} parent=114 // pred_check
          %p1024 = pneg %p106
        $region117: #{model_forward.3} parent=114 // pred_check_branch
          %1026 = sbr.rel (%p1024) target = $region119
        $region118: #{model_forward.3} parent=114 // pred_region
          %s1027 = sand.u32 %s91, 1
          %s1028 = sand.u32 %s91, 1
          %s1029 = smul.addr %s1028, 16
          %s1030 = scalar_lea.vmem [#allocation3], %s1029
        $region119: #{model_forward.3} parent=114 // pred_fallthru
          _
      $region115: #{model_forward.3} parent=5 // pred_fallthru
        _
    $region6: #{model_forward.3} parent=1 // loop_footer
      %s13 = sadd.s32 1, %s9
    $region7: #{model_forward.3} parent=1 // loop_footer_branch
      %8 = sbr.rel target = $region3
    $region8: #{model_forward.3} parent=1 // loop_exit
      _

</llo_original>
